<compile_context>
chip_gen: v5e
topology: v5e:2x2
jax: 0.10.0
libtpu: 0.0.40
codegen_flags: <defaults>
</compile_context>

<pallas_src>
import jax
import jax.numpy as jnp
from jax import lax
from jax.experimental import pallas as pl
from jax.experimental.pallas import tpu as pltpu


# ----------------------------- Pallas kernel -------------------------------

def rnn_fc_kernel(u_ref, whh0_ref, wih1_ref, whh1_ref, b1_ref, wfc_ref, bfc_ref,
                  out_ref, h1, h2):
    """One batch block: full T-step recurrence + fused FC accumulation.

    u_ref    : (T, BB, Hp) bf16   precomputed x_t @ W_ih0 + b0
    whh0_ref : (Hp, Hp)    bf16   layer-0 hidden->hidden
    wih1_ref : (Hp, Hp)    bf16   layer-1 input->hidden
    whh1_ref : (Hp, Hp)    bf16   layer-1 hidden->hidden
    b1_ref   : (1, Hp)     f32
    wfc_ref  : (T, Hp, Cp) bf16   FC weight, time-sliced (lane-padded classes)
    bfc_ref  : (1, Cp)     f32
    out_ref  : (BB, Cp)    f32    logits for this batch block (accumulated)
    h1, h2   : (BB, Hp)    f32    VMEM hidden-state scratch
    """
    T = u_ref.shape[0]
    f32 = jnp.float32
    bf16 = jnp.bfloat16

    # hoist the (1, Hp) -> (BB, Hp) bias broadcast out of the loop
    # (JAX does not CSE broadcast_in_dim inside loops)
    b1_full = jnp.broadcast_to(b1_ref[...], h1.shape)

    # ---- peeled t = 0: h1_{-1} = h2_{-1} = 0, skip both hidden matmuls ----
    h1_new = jnp.tanh(u_ref[0].astype(f32))
    h2_new = jnp.tanh(jnp.dot(h1_new.astype(bf16), wih1_ref[...],
                              preferred_element_type=f32) + b1_full)
    h1[...] = h1_new
    h2[...] = h2_new
    # init resident output block: FC bias + t=0 contribution
    out_ref[...] = (jnp.broadcast_to(bfc_ref[...], out_ref.shape)
                    + jnp.dot(h2_new.astype(bf16), wfc_ref[0],
                              preferred_element_type=f32))

    def step(t, carry):
        # h2_{t-1} @ W_hh1 depends only on last step's h2 -> issue it first so
        # the MXU overlaps the layer-0 tanh (EUP) on the serial critical path.
        hh2 = jnp.dot(h2[...].astype(bf16), whh1_ref[...],
                      preferred_element_type=f32)

        # layer 0: h1_t = tanh(U_t + h1_{t-1} @ W_hh0)    (adds/tanh in f32)
        pre1 = u_ref[t].astype(f32) + jnp.dot(h1[...].astype(bf16),
                                              whh0_ref[...],
                                              preferred_element_type=f32)
        h1_new = jnp.tanh(pre1)

        # layer 1 (split, no per-step concat): h2_t = tanh(h1_t@W_ih1 + hh2 + b1)
        pre2 = jnp.dot(h1_new.astype(bf16), wih1_ref[...],
                       preferred_element_type=f32) + hh2 + b1_full
        h2_new = jnp.tanh(pre2)

        h1[...] = h1_new
        h2[...] = h2_new

        # fused FC head: logits += h2_t @ W_fc[t]   (f32 accumulation)
        # TODO(synk): if bundle profiling shows the MXU slot is binding, move
        # this to one (BB, T*Hp) @ (T*Hp, Cp) matmul after the loop.
        out_ref[...] += jnp.dot(h2_new.astype(bf16), wfc_ref[t],
                                preferred_element_type=f32)
        return carry

    # TODO(synk): sweep partial unroll (2/4) at real shapes (T=28, H=256) if
    # the bundle dump shows vreg spills from full unrolling.
    lax.fori_loop(1, T, step, 0, unroll=True)


# ------------------------------- wrapper ------------------------------------

def _round_up(n, m):
    return ((n + m - 1) // m) * m


@jax.jit
def rnn_forward(x, wih0, whh0, b0, wih1, whh1, b1, wfc3, bfc):
    """x: (B, T, I) float32.  Returns logits (B, C) float32."""
    B, T, I = x.shape
    H = whh0.shape[0]
    C = bfc.shape[-1]

    f32 = jnp.float32
    bf16 = jnp.bfloat16

    Hp = _round_up(H, 128)    # lane-aligned hidden
    Cp = _round_up(C, 128)    # lane-dense output

    # ---- batch blocking: >=2 blocks whenever Bp >= 16 so v7x's two
    # TensorCores both get work; cap block at 128; pad Bp to a BB multiple ----
    Bp0 = _round_up(B, 8)
    if Bp0 <= 8:
        BB = Bp0
    elif Bp0 <= 256:
        BB = _round_up((Bp0 + 1) // 2, 8)
    else:
        BB = 128
    Bp = _round_up(Bp0, BB)
    NB = Bp // BB

    # ---- hoisted layer-0 input projection (one big parallel matmul) ----
    # Transpose x BEFORE the matmul (shuffles I-wide rows, not H-wide ones)
    # and emit U directly in the (T, Bp, Hp) layout the kernel consumes.
    xt = jnp.transpose(x.astype(f32), (1, 0, 2))                 # (T, B, I)
    u = jnp.einsum('tbi,ih->tbh', xt, wih0.astype(f32)) + b0     # (T, B, H)
    u = jnp.pad(u, ((0, 0), (0, Bp - B), (0, Hp - H))).astype(bf16)

    # ---- padded weights (zero padding is inert); MXU operands in bf16 ----
    whh0_p = jnp.pad(whh0, ((0, Hp - H), (0, Hp - H))).astype(bf16)
    wih1_p = jnp.pad(wih1, ((0, Hp - H), (0, Hp - H))).astype(bf16)
    whh1_p = jnp.pad(whh1, ((0, Hp - H), (0, Hp - H))).astype(bf16)
    b1_p = jnp.pad(b1, ((0, 0), (0, Hp - H)))                    # f32
    wfc_p = jnp.pad(wfc3, ((0, 0), (0, Hp - H), (0, Cp - C))).astype(bf16)
    bfc_p = jnp.pad(bfc, ((0, 0), (0, Cp - C)))                  # f32

    inv = pl.Buffered(1)   # loop-invariant blocks: single-buffer (save VMEM)

    out = pl.pallas_call(
        rnn_fc_kernel,
        out_shape=jax.ShapeDtypeStruct((Bp, Cp), jnp.float32),
        grid=(NB,),
        in_specs=[
            pl.BlockSpec((T, BB, Hp), lambda b: (0, b, 0)),          # U (per blk)
            pl.BlockSpec((Hp, Hp), lambda b: (0, 0), pipeline_mode=inv),
            pl.BlockSpec((Hp, Hp), lambda b: (0, 0), pipeline_mode=inv),
            pl.BlockSpec((Hp, Hp), lambda b: (0, 0), pipeline_mode=inv),
            pl.BlockSpec((1, Hp), lambda b: (0, 0), pipeline_mode=inv),
            pl.BlockSpec((T, Hp, Cp), lambda b: (0, 0, 0), pipeline_mode=inv),
            pl.BlockSpec((1, Cp), lambda b: (0, 0), pipeline_mode=inv),
        ],
        out_specs=pl.BlockSpec((BB, Cp), lambda b: (b, 0)),
        scratch_shapes=[
            pltpu.VMEM((BB, Hp), jnp.float32),   # h1
            pltpu.VMEM((BB, Hp), jnp.float32),   # h2
        ],
        compiler_params=pltpu.CompilerParams(
            dimension_semantics=("parallel",),
            vmem_limit_bytes=64 * 1024 * 1024),
    )(u, whh0_p, wih1_p, whh1_p, b1_p, wfc_p, bfc_p)

    return out[:B, :C]


# --------------------------- pure-JAX reference ------------------------------

def ref_forward(x, wih0, whh0, b0, wih1, whh1, b1, wfc3, bfc):
    B, T, I = x.shape
    H = whh0.shape[0]
    C = bfc.shape[-1]
    h1 = jnp.zeros((B, H), jnp.float32)
    h2 = jnp.zeros((B, H), jnp.float32)
    outs = []
    for t in range(T):
        h1 = jnp.tanh(x[:, t] @ wih0 + h1 @ whh0 + b0)
        h2 = jnp.tanh(h1 @ wih1 + h2 @ whh1 + b1)
        outs.append(h2)
    out = jnp.stack(outs, axis=1).reshape(B, T * H)
    return out @ wfc3.reshape(T * H, C) + bfc


# --------------------------------- main --------------------------------------

if __name__ == "__main__":
    # Small shapes consistent with the module (scaled down from
    # input_size=28, hidden=256, seq=28, classes=10, layers=2).
    B, T, I, H, C = 2, 8, 8, 32, 10

    key = jax.random.PRNGKey(0)
    ks = jax.random.split(key, 10)
    bound = 1.0 / jnp.sqrt(H)
    u = lambda k, shape: jax.random.uniform(k, shape, jnp.float32, -bound, bound)

    x = jax.random.normal(ks[0], (B, T, I), jnp.float32)

    # nn.RNN params, pre-transposed to (in, out); biases b_ih + b_hh folded.
    wih0 = u(ks[1], (I, H))
    whh0 = u(ks[2], (H, H))
    b0 = u(ks[3], (1, H)) + u(ks[4], (1, H))
    wih1 = u(ks[5], (H, H))
    whh1 = u(ks[6], (H, H))
    b1 = u(ks[7], (1, H)) + u(ks[8], (1, H))

    # fc: Linear(H*T, C); weight stored as (T, H, C) so flat index t*H+h
    # matches PyTorch's out.reshape(B, -1) ordering.
    kw, kb = jax.random.split(ks[9])
    fc_bound = 1.0 / jnp.sqrt(H * T)
    wfc3 = jax.random.uniform(kw, (T, H, C), jnp.float32, -fc_bound, fc_bound)
    bfc = jax.random.uniform(kb, (1, C), jnp.float32, -fc_bound, fc_bound)

    logits = rnn_forward(x, wih0, whh0, b0, wih1, whh1, b1, wfc3, bfc)
    logits = jax.block_until_ready(logits)

    ref = ref_forward(x, wih0, whh0, b0, wih1, whh1, b1, wfc3, bfc)
    assert logits.shape == (B, C)
    # bf16 MXU operands (f32 accumulation / tanh): ~1e-2 level error expected.
    max_err = jnp.max(jnp.abs(logits - ref))
    assert jnp.allclose(logits, ref, atol=3e-2, rtol=3e-2), (
        f"mismatch: max abs err {max_err}")

    print("KERNEL_OK")
</pallas_src>

<mosaic_0001>
module attributes {stable_mosaic.version = 11 : i64} {
  func.func @rnn_fc_kernel(%arg0: i32, %arg1: memref<8x8x128xbf16, #tpu.memory_space<vmem>>, %arg2: memref<128x128xbf16, #tpu.memory_space<vmem>>, %arg3: memref<128x128xbf16, #tpu.memory_space<vmem>>, %arg4: memref<128x128xbf16, #tpu.memory_space<vmem>>, %arg5: memref<1x128xf32, #tpu.memory_space<vmem>>, %arg6: memref<8x128x128xbf16, #tpu.memory_space<vmem>>, %arg7: memref<1x128xf32, #tpu.memory_space<vmem>>, %arg8: memref<8x128xf32, #tpu.memory_space<vmem>>, %arg9: memref<8x128xf32, #tpu.memory_space<vmem>>, %arg10: memref<8x128xf32, #tpu.memory_space<vmem>>) attributes {dimension_semantics = [#tpu.dimension_semantics<parallel>], iteration_bounds = array<i64: 1>, scalar_prefetch = 0 : i64, scratch_operands = 2 : i64, tpu.core_type = #tpu.core_type<tc>, window_params = [{transform_indices = @transform_0, window_bounds = array<i64: 8, 8, 128>}, {pipeline_mode = #tpu.pipeline_mode<synchronous>, transform_indices = @transform_1, window_bounds = array<i64: 128, 128>}, {pipeline_mode = #tpu.pipeline_mode<synchronous>, transform_indices = @transform_2, window_bounds = array<i64: 128, 128>}, {pipeline_mode = #tpu.pipeline_mode<synchronous>, transform_indices = @transform_3, window_bounds = array<i64: 128, 128>}, {pipeline_mode = #tpu.pipeline_mode<synchronous>, transform_indices = @transform_4, window_bounds = array<i64: 1, 128>}, {pipeline_mode = #tpu.pipeline_mode<synchronous>, transform_indices = @transform_5, window_bounds = array<i64: 8, 128, 128>}, {pipeline_mode = #tpu.pipeline_mode<synchronous>, transform_indices = @transform_6, window_bounds = array<i64: 1, 128>}, {transform_indices = @transform_7, window_bounds = array<i64: 8, 128>}]} {
    %c0 = arith.constant 0 : index
    %c0_0 = arith.constant 0 : index
    %0 = vector.load %arg5[%c0, %c0_0] : memref<1x128xf32, #tpu.memory_space<vmem>>, vector<1x128xf32>
    %1 = vector.shape_cast %0 : vector<1x128xf32> to vector<1x128xf32>
    %2 = vector.broadcast %1 : vector<1x128xf32> to vector<8x128xf32>
    %c0_1 = arith.constant 0 : index
    %c0_2 = arith.constant 0 : index
    %c0_3 = arith.constant 0 : index
    %3 = vector.load %arg1[%c0_1, %c0_2, %c0_3] : memref<8x8x128xbf16, #tpu.memory_space<vmem>>, vector<1x8x128xbf16>
    %4 = vector.shape_cast %3 : vector<1x8x128xbf16> to vector<8x128xbf16>
    %5 = arith.extf %4 : vector<8x128xbf16> to vector<8x128xf32>
    %6 = math.tanh %5 : vector<8x128xf32>
    %7 = arith.truncf %6 : vector<8x128xf32> to vector<8x128xbf16>
    %c0_4 = arith.constant 0 : index
    %c0_5 = arith.constant 0 : index
    %8 = vector.load %arg3[%c0_4, %c0_5] : memref<128x128xbf16, #tpu.memory_space<vmem>>, vector<128x128xbf16>
    %cst = arith.constant dense<0.000000e+00> : vector<8x128xf32>
    %9 = tpu.matmul %7, %8, %cst {dimension_numbers = #tpu.dot_dimension_numbers<[1], [0], [0], [1], [0, 0, 1, 1], [], []>} : vector<8x128xbf16>, vector<128x128xbf16>, vector<8x128xf32> -> vector<8x128xf32>
    %10 = arith.addf %9, %2 : vector<8x128xf32>
    %11 = math.tanh %10 : vector<8x128xf32>
    %c0_6 = arith.constant 0 : index
    %c0_7 = arith.constant 0 : index
    %12 = vector.load %arg9[%c0_6, %c0_7] : memref<8x128xf32, #tpu.memory_space<vmem>>, vector<8x128xf32>
    tpu.vector_store %arg9[%c0_6, %c0_7], %6 {strides = array<i32>} : memref<8x128xf32, #tpu.memory_space<vmem>>, vector<8x128xf32>,
    %c0_8 = arith.constant 0 : index
    %c0_9 = arith.constant 0 : index
    %13 = vector.load %arg10[%c0_8, %c0_9] : memref<8x128xf32, #tpu.memory_space<vmem>>, vector<8x128xf32>
    tpu.vector_store %arg10[%c0_8, %c0_9], %11 {strides = array<i32>} : memref<8x128xf32, #tpu.memory_space<vmem>>, vector<8x128xf32>,
    %c0_10 = arith.constant 0 : index
    %c0_11 = arith.constant 0 : index
    %14 = vector.load %arg7[%c0_10, %c0_11] : memref<1x128xf32, #tpu.memory_space<vmem>>, vector<1x128xf32>
    %15 = vector.shape_cast %14 : vector<1x128xf32> to vector<1x128xf32>
    %16 = vector.broadcast %15 : vector<1x128xf32> to vector<8x128xf32>
    %17 = arith.truncf %11 : vector<8x128xf32> to vector<8x128xbf16>
    %c0_12 = arith.constant 0 : index
    %c0_13 = arith.constant 0 : index
    %c0_14 = arith.constant 0 : index
    %18 = vector.load %arg6[%c0_12, %c0_13, %c0_14] : memref<8x128x128xbf16, #tpu.memory_space<vmem>>, vector<1x128x128xbf16>
    %19 = vector.shape_cast %18 : vector<1x128x128xbf16> to vector<128x128xbf16>
    %cst_15 = arith.constant dense<0.000000e+00> : vector<8x128xf32>
    %20 = tpu.matmul %17, %19, %cst_15 {dimension_numbers = #tpu.dot_dimension_numbers<[1], [0], [0], [1], [0, 0, 1, 1], [], []>} : vector<8x128xbf16>, vector<128x128xbf16>, vector<8x128xf32> -> vector<8x128xf32>
    %21 = arith.addf %16, %20 : vector<8x128xf32>
    %c0_16 = arith.constant 0 : index
    %c0_17 = arith.constant 0 : index
    %22 = vector.load %arg8[%c0_16, %c0_17] : memref<8x128xf32, #tpu.memory_space<vmem>>, vector<8x128xf32>
    tpu.vector_store %arg8[%c0_16, %c0_17], %21 {strides = array<i32>} : memref<8x128xf32, #tpu.memory_space<vmem>>, vector<8x128xf32>,
    %c1_i32 = arith.constant 1 : i32
    %c0_18 = arith.constant 0 : index
    %c0_19 = arith.constant 0 : index
    %23 = vector.load %arg10[%c0_18, %c0_19] : memref<8x128xf32, #tpu.memory_space<vmem>>, vector<8x128xf32>
    %24 = arith.truncf %23 : vector<8x128xf32> to vector<8x128xbf16>
    %c0_20 = arith.constant 0 : index
    %c0_21 = arith.constant 0 : index
    %25 = vector.load %arg4[%c0_20, %c0_21] : memref<128x128xbf16, #tpu.memory_space<vmem>>, vector<128x128xbf16>
    %cst_22 = arith.constant dense<0.000000e+00> : vector<8x128xf32>
    %26 = tpu.matmul %24, %25, %cst_22 {dimension_numbers = #tpu.dot_dimension_numbers<[1], [0], [0], [1], [0, 0, 1, 1], [], []>} : vector<8x128xbf16>, vector<128x128xbf16>, vector<8x128xf32> -> vector<8x128xf32>
    %27 = arith.index_cast %c1_i32 : i32 to index
    %c0_23 = arith.constant 0 : index
    %c0_24 = arith.constant 0 : index
    %28 = vector.load %arg1[%27, %c0_23, %c0_24] : memref<8x8x128xbf16, #tpu.memory_space<vmem>>, vector<1x8x128xbf16>
    %29 = vector.shape_cast %28 : vector<1x8x128xbf16> to vector<8x128xbf16>
    %30 = arith.extf %29 : vector<8x128xbf16> to vector<8x128xf32>
    %c0_25 = arith.constant 0 : index
    %c0_26 = arith.constant 0 : index
    %31 = vector.load %arg9[%c0_25, %c0_26] : memref<8x128xf32, #tpu.memory_space<vmem>>, vector<8x128xf32>
    %32 = arith.truncf %31 : vector<8x128xf32> to vector<8x128xbf16>
    %c0_27 = arith.constant 0 : index
    %c0_28 = arith.constant 0 : index
    %33 = vector.load %arg2[%c0_27, %c0_28] : memref<128x128xbf16, #tpu.memory_space<vmem>>, vector<128x128xbf16>
    %cst_29 = arith.constant dense<0.000000e+00> : vector<8x128xf32>
    %34 = tpu.matmul %32, %33, %cst_29 {dimension_numbers = #tpu.dot_dimension_numbers<[1], [0], [0], [1], [0, 0, 1, 1], [], []>} : vector<8x128xbf16>, vector<128x128xbf16>, vector<8x128xf32> -> vector<8x128xf32>
    %35 = arith.addf %30, %34 : vector<8x128xf32>
    %36 = math.tanh %35 : vector<8x128xf32>
    %37 = arith.truncf %36 : vector<8x128xf32> to vector<8x128xbf16>
    %c0_30 = arith.constant 0 : index
    %c0_31 = arith.constant 0 : index
    %38 = vector.load %arg3[%c0_30, %c0_31] : memref<128x128xbf16, #tpu.memory_space<vmem>>, vector<128x128xbf16>
    %cst_32 = arith.constant dense<0.000000e+00> : vector<8x128xf32>
    %39 = tpu.matmul %37, %38, %cst_32 {dimension_numbers = #tpu.dot_dimension_numbers<[1], [0], [0], [1], [0, 0, 1, 1], [], []>} : vector<8x128xbf16>, vector<128x128xbf16>, vector<8x128xf32> -> vector<8x128xf32>
    %40 = arith.addf %39, %26 : vector<8x128xf32>
    %41 = arith.addf %40, %2 : vector<8x128xf32>
    %42 = math.tanh %41 : vector<8x128xf32>
    %c0_33 = arith.constant 0 : index
    %c0_34 = arith.constant 0 : index
    %43 = vector.load %arg9[%c0_33, %c0_34] : memref<8x128xf32, #tpu.memory_space<vmem>>, vector<8x128xf32>
    tpu.vector_store %arg9[%c0_33, %c0_34], %36 {strides = array<i32>} : memref<8x128xf32, #tpu.memory_space<vmem>>, vector<8x128xf32>,
    %c0_35 = arith.constant 0 : index
    %c0_36 = arith.constant 0 : index
    %44 = vector.load %arg10[%c0_35, %c0_36] : memref<8x128xf32, #tpu.memory_space<vmem>>, vector<8x128xf32>
    tpu.vector_store %arg10[%c0_35, %c0_36], %42 {strides = array<i32>} : memref<8x128xf32, #tpu.memory_space<vmem>>, vector<8x128xf32>,
    %c0_37 = arith.constant 0 : index
    %c0_38 = arith.constant 0 : index
    %45 = vector.load %arg8[%c0_37, %c0_38] : memref<8x128xf32, #tpu.memory_space<vmem>>, vector<8x128xf32>
    %46 = arith.truncf %42 : vector<8x128xf32> to vector<8x128xbf16>
    %47 = arith.index_cast %c1_i32 : i32 to index
    %c0_39 = arith.constant 0 : index
    %c0_40 = arith.constant 0 : index
    %48 = vector.load %arg6[%47, %c0_39, %c0_40] : memref<8x128x128xbf16, #tpu.memory_space<vmem>>, vector<1x128x128xbf16>
    %49 = vector.shape_cast %48 : vector<1x128x128xbf16> to vector<128x128xbf16>
    %cst_41 = arith.constant dense<0.000000e+00> : vector<8x128xf32>
    %50 = tpu.matmul %46, %49, %cst_41 {dimension_numbers = #tpu.dot_dimension_numbers<[1], [0], [0], [1], [0, 0, 1, 1], [], []>} : vector<8x128xbf16>, vector<128x128xbf16>, vector<8x128xf32> -> vector<8x128xf32>
    %51 = arith.addf %45, %50 : vector<8x128xf32>
    %c0_42 = arith.constant 0 : index
    %c0_43 = arith.constant 0 : index
    %52 = vector.load %arg8[%c0_42, %c0_43] : memref<8x128xf32, #tpu.memory_space<vmem>>, vector<8x128xf32>
    tpu.vector_store %arg8[%c0_42, %c0_43], %51 {strides = array<i32>} : memref<8x128xf32, #tpu.memory_space<vmem>>, vector<8x128xf32>,
    %c2_i32 = arith.constant 2 : i32
    %c0_44 = arith.constant 0 : index
    %c0_45 = arith.constant 0 : index
    %53 = vector.load %arg10[%c0_44, %c0_45] : memref<8x128xf32, #tpu.memory_space<vmem>>, vector<8x128xf32>
    %54 = arith.truncf %53 : vector<8x128xf32> to vector<8x128xbf16>
    %c0_46 = arith.constant 0 : index
    %c0_47 = arith.constant 0 : index
    %55 = vector.load %arg4[%c0_46, %c0_47] : memref<128x128xbf16, #tpu.memory_space<vmem>>, vector<128x128xbf16>
    %cst_48 = arith.constant dense<0.000000e+00> : vector<8x128xf32>
    %56 = tpu.matmul %54, %55, %cst_48 {dimension_numbers = #tpu.dot_dimension_numbers<[1], [0], [0], [1], [0, 0, 1, 1], [], []>} : vector<8x128xbf16>, vector<128x128xbf16>, vector<8x128xf32> -> vector<8x128xf32>
    %57 = arith.index_cast %c2_i32 : i32 to index
    %c0_49 = arith.constant 0 : index
    %c0_50 = arith.constant 0 : index
    %58 = vector.load %arg1[%57, %c0_49, %c0_50] : memref<8x8x128xbf16, #tpu.memory_space<vmem>>, vector<1x8x128xbf16>
    %59 = vector.shape_cast %58 : vector<1x8x128xbf16> to vector<8x128xbf16>
    %60 = arith.extf %59 : vector<8x128xbf16> to vector<8x128xf32>
    %c0_51 = arith.constant 0 : index
    %c0_52 = arith.constant 0 : index
    %61 = vector.load %arg9[%c0_51, %c0_52] : memref<8x128xf32, #tpu.memory_space<vmem>>, vector<8x128xf32>
    %62 = arith.truncf %61 : vector<8x128xf32> to vector<8x128xbf16>
    %c0_53 = arith.constant 0 : index
    %c0_54 = arith.constant 0 : index
    %63 = vector.load %arg2[%c0_53, %c0_54] : memref<128x128xbf16, #tpu.memory_space<vmem>>, vector<128x128xbf16>
    %cst_55 = arith.constant dense<0.000000e+00> : vector<8x128xf32>
    %64 = tpu.matmul %62, %63, %cst_55 {dimension_numbers = #tpu.dot_dimension_numbers<[1], [0], [0], [1], [0, 0, 1, 1], [], []>} : vector<8x128xbf16>, vector<128x128xbf16>, vector<8x128xf32> -> vector<8x128xf32>
    %65 = arith.addf %60, %64 : vector<8x128xf32>
    %66 = math.tanh %65 : vector<8x128xf32>
    %67 = arith.truncf %66 : vector<8x128xf32> to vector<8x128xbf16>
    %c0_56 = arith.constant 0 : index
    %c0_57 = arith.constant 0 : index
    %68 = vector.load %arg3[%c0_56, %c0_57] : memref<128x128xbf16, #tpu.memory_space<vmem>>, vector<128x128xbf16>
    %cst_58 = arith.constant dense<0.000000e+00> : vector<8x128xf32>
    %69 = tpu.matmul %67, %68, %cst_58 {dimension_numbers = #tpu.dot_dimension_numbers<[1], [0], [0], [1], [0, 0, 1, 1], [], []>} : vector<8x128xbf16>, vector<128x128xbf16>, vector<8x128xf32> -> vector<8x128xf32>
    %70 = arith.addf %69, %56 : vector<8x128xf32>
    %71 = arith.addf %70, %2 : vector<8x128xf32>
    %72 = math.tanh %71 : vector<8x128xf32>
    %c0_59 = arith.constant 0 : index
    %c0_60 = arith.constant 0 : index
    %73 = vector.load %arg9[%c0_59, %c0_60] : memref<8x128xf32, #tpu.memory_space<vmem>>, vector<8x128xf32>
    tpu.vector_store %arg9[%c0_59, %c0_60], %66 {strides = array<i32>} : memref<8x128xf32, #tpu.memory_space<vmem>>, vector<8x128xf32>,
    %c0_61 = arith.constant 0 : index
    %c0_62 = arith.constant 0 : index
    %74 = vector.load %arg10[%c0_61, %c0_62] : memref<8x128xf32, #tpu.memory_space<vmem>>, vector<8x128xf32>
    tpu.vector_store %arg10[%c0_61, %c0_62], %72 {strides = array<i32>} : memref<8x128xf32, #tpu.memory_space<vmem>>, vector<8x128xf32>,
    %c0_63 = arith.constant 0 : index
    %c0_64 = arith.constant 0 : index
    %75 = vector.load %arg8[%c0_63, %c0_64] : memref<8x128xf32, #tpu.memory_space<vmem>>, vector<8x128xf32>
    %76 = arith.truncf %72 : vector<8x128xf32> to vector<8x128xbf16>
    %77 = arith.index_cast %c2_i32 : i32 to index
    %c0_65 = arith.constant 0 : index
    %c0_66 = arith.constant 0 : index
    %78 = vector.load %arg6[%77, %c0_65, %c0_66] : memref<8x128x128xbf16, #tpu.memory_space<vmem>>, vector<1x128x128xbf16>
    %79 = vector.shape_cast %78 : vector<1x128x128xbf16> to vector<128x128xbf16>
    %cst_67 = arith.constant dense<0.000000e+00> : vector<8x128xf32>
    %80 = tpu.matmul %76, %79, %cst_67 {dimension_numbers = #tpu.dot_dimension_numbers<[1], [0], [0], [1], [0, 0, 1, 1], [], []>} : vector<8x128xbf16>, vector<128x128xbf16>, vector<8x128xf32> -> vector<8x128xf32>
    %81 = arith.addf %75, %80 : vector<8x128xf32>
    %c0_68 = arith.constant 0 : index
    %c0_69 = arith.constant 0 : index
    %82 = vector.load %arg8[%c0_68, %c0_69] : memref<8x128xf32, #tpu.memory_space<vmem>>, vector<8x128xf32>
    tpu.vector_store %arg8[%c0_68, %c0_69], %81 {strides = array<i32>} : memref<8x128xf32, #tpu.memory_space<vmem>>, vector<8x128xf32>,
    %c3_i32 = arith.constant 3 : i32
    %c0_70 = arith.constant 0 : index
    %c0_71 = arith.constant 0 : index
    %83 = vector.load %arg10[%c0_70, %c0_71] : memref<8x128xf32, #tpu.memory_space<vmem>>, vector<8x128xf32>
    %84 = arith.truncf %83 : vector<8x128xf32> to vector<8x128xbf16>
    %c0_72 = arith.constant 0 : index
    %c0_73 = arith.constant 0 : index
    %85 = vector.load %arg4[%c0_72, %c0_73] : memref<128x128xbf16, #tpu.memory_space<vmem>>, vector<128x128xbf16>
    %cst_74 = arith.constant dense<0.000000e+00> : vector<8x128xf32>
    %86 = tpu.matmul %84, %85, %cst_74 {dimension_numbers = #tpu.dot_dimension_numbers<[1], [0], [0], [1], [0, 0, 1, 1], [], []>} : vector<8x128xbf16>, vector<128x128xbf16>, vector<8x128xf32> -> vector<8x128xf32>
    %87 = arith.index_cast %c3_i32 : i32 to index
    %c0_75 = arith.constant 0 : index
    %c0_76 = arith.constant 0 : index
    %88 = vector.load %arg1[%87, %c0_75, %c0_76] : memref<8x8x128xbf16, #tpu.memory_space<vmem>>, vector<1x8x128xbf16>
    %89 = vector.shape_cast %88 : vector<1x8x128xbf16> to vector<8x128xbf16>
    %90 = arith.extf %89 : vector<8x128xbf16> to vector<8x128xf32>
    %c0_77 = arith.constant 0 : index
    %c0_78 = arith.constant 0 : index
    %91 = vector.load %arg9[%c0_77, %c0_78] : memref<8x128xf32, #tpu.memory_space<vmem>>, vector<8x128xf32>
    %92 = arith.truncf %91 : vector<8x128xf32> to vector<8x128xbf16>
    %c0_79 = arith.constant 0 : index
    %c0_80 = arith.constant 0 : index
    %93 = vector.load %arg2[%c0_79, %c0_80] : memref<128x128xbf16, #tpu.memory_space<vmem>>, vector<128x128xbf16>
    %cst_81 = arith.constant dense<0.000000e+00> : vector<8x128xf32>
    %94 = tpu.matmul %92, %93, %cst_81 {dimension_numbers = #tpu.dot_dimension_numbers<[1], [0], [0], [1], [0, 0, 1, 1], [], []>} : vector<8x128xbf16>, vector<128x128xbf16>, vector<8x128xf32> -> vector<8x128xf32>
    %95 = arith.addf %90, %94 : vector<8x128xf32>
    %96 = math.tanh %95 : vector<8x128xf32>
    %97 = arith.truncf %96 : vector<8x128xf32> to vector<8x128xbf16>
    %c0_82 = arith.constant 0 : index
    %c0_83 = arith.constant 0 : index
    %98 = vector.load %arg3[%c0_82, %c0_83] : memref<128x128xbf16, #tpu.memory_space<vmem>>, vector<128x128xbf16>
    %cst_84 = arith.constant dense<0.000000e+00> : vector<8x128xf32>
    %99 = tpu.matmul %97, %98, %cst_84 {dimension_numbers = #tpu.dot_dimension_numbers<[1], [0], [0], [1], [0, 0, 1, 1], [], []>} : vector<8x128xbf16>, vector<128x128xbf16>, vector<8x128xf32> -> vector<8x128xf32>
    %100 = arith.addf %99, %86 : vector<8x128xf32>
    %101 = arith.addf %100, %2 : vector<8x128xf32>
    %102 = math.tanh %101 : vector<8x128xf32>
    %c0_85 = arith.constant 0 : index
    %c0_86 = arith.constant 0 : index
    %103 = vector.load %arg9[%c0_85, %c0_86] : memref<8x128xf32, #tpu.memory_space<vmem>>, vector<8x128xf32>
    tpu.vector_store %arg9[%c0_85, %c0_86], %96 {strides = array<i32>} : memref<8x128xf32, #tpu.memory_space<vmem>>, vector<8x128xf32>,
    %c0_87 = arith.constant 0 : index
    %c0_88 = arith.constant 0 : index
    %104 = vector.load %arg10[%c0_87, %c0_88] : memref<8x128xf32, #tpu.memory_space<vmem>>, vector<8x128xf32>
    tpu.vector_store %arg10[%c0_87, %c0_88], %102 {strides = array<i32>} : memref<8x128xf32, #tpu.memory_space<vmem>>, vector<8x128xf32>,
    %c0_89 = arith.constant 0 : index
    %c0_90 = arith.constant 0 : index
    %105 = vector.load %arg8[%c0_89, %c0_90] : memref<8x128xf32, #tpu.memory_space<vmem>>, vector<8x128xf32>
    %106 = arith.truncf %102 : vector<8x128xf32> to vector<8x128xbf16>
    %107 = arith.index_cast %c3_i32 : i32 to index
    %c0_91 = arith.constant 0 : index
    %c0_92 = arith.constant 0 : index
    %108 = vector.load %arg6[%107, %c0_91, %c0_92] : memref<8x128x128xbf16, #tpu.memory_space<vmem>>, vector<1x128x128xbf16>
    %109 = vector.shape_cast %108 : vector<1x128x128xbf16> to vector<128x128xbf16>
    %cst_93 = arith.constant dense<0.000000e+00> : vector<8x128xf32>
    %110 = tpu.matmul %106, %109, %cst_93 {dimension_numbers = #tpu.dot_dimension_numbers<[1], [0], [0], [1], [0, 0, 1, 1], [], []>} : vector<8x128xbf16>, vector<128x128xbf16>, vector<8x128xf32> -> vector<8x128xf32>
    %111 = arith.addf %105, %110 : vector<8x128xf32>
    %c0_94 = arith.constant 0 : index
    %c0_95 = arith.constant 0 : index
    %112 = vector.load %arg8[%c0_94, %c0_95] : memref<8x128xf32, #tpu.memory_space<vmem>>, vector<8x128xf32>
    tpu.vector_store %arg8[%c0_94, %c0_95], %111 {strides = array<i32>} : memref<8x128xf32, #tpu.memory_space<vmem>>, vector<8x128xf32>,
    %c4_i32 = arith.constant 4 : i32
    %c0_96 = arith.constant 0 : index
    %c0_97 = arith.constant 0 : index
    %113 = vector.load %arg10[%c0_96, %c0_97] : memref<8x128xf32, #tpu.memory_space<vmem>>, vector<8x128xf32>
    %114 = arith.truncf %113 : vector<8x128xf32> to vector<8x128xbf16>
    %c0_98 = arith.constant 0 : index
    %c0_99 = arith.constant 0 : index
    %115 = vector.load %arg4[%c0_98, %c0_99] : memref<128x128xbf16, #tpu.memory_space<vmem>>, vector<128x128xbf16>
    %cst_100 = arith.constant dense<0.000000e+00> : vector<8x128xf32>
    %116 = tpu.matmul %114, %115, %cst_100 {dimension_numbers = #tpu.dot_dimension_numbers<[1], [0], [0], [1], [0, 0, 1, 1], [], []>} : vector<8x128xbf16>, vector<128x128xbf16>, vector<8x128xf32> -> vector<8x128xf32>
    %117 = arith.index_cast %c4_i32 : i32 to index
    %c0_101 = arith.constant 0 : index
    %c0_102 = arith.constant 0 : index
    %118 = vector.load %arg1[%117, %c0_101, %c0_102] : memref<8x8x128xbf16, #tpu.memory_space<vmem>>, vector<1x8x128xbf16>
    %119 = vector.shape_cast %118 : vector<1x8x128xbf16> to vector<8x128xbf16>
    %120 = arith.extf %119 : vector<8x128xbf16> to vector<8x128xf32>
    %c0_103 = arith.constant 0 : index
    %c0_104 = arith.constant 0 : index
    %121 = vector.load %arg9[%c0_103, %c0_104] : memref<8x128xf32, #tpu.memory_space<vmem>>, vector<8x128xf32>
    %122 = arith.truncf %121 : vector<8x128xf32> to vector<8x128xbf16>
    %c0_105 = arith.constant 0 : index
    %c0_106 = arith.constant 0 : index
    %123 = vector.load %arg2[%c0_105, %c0_106] : memref<128x128xbf16, #tpu.memory_space<vmem>>, vector<128x128xbf16>
    %cst_107 = arith.constant dense<0.000000e+00> : vector<8x128xf32>
    %124 = tpu.matmul %122, %123, %cst_107 {dimension_numbers = #tpu.dot_dimension_numbers<[1], [0], [0], [1], [0, 0, 1, 1], [], []>} : vector<8x128xbf16>, vector<128x128xbf16>, vector<8x128xf32> -> vector<8x128xf32>
    %125 = arith.addf %120, %124 : vector<8x128xf32>
    %126 = math.tanh %125 : vector<8x128xf32>
    %127 = arith.truncf %126 : vector<8x128xf32> to vector<8x128xbf16>
    %c0_108 = arith.constant 0 : index
    %c0_109 = arith.constant 0 : index
    %128 = vector.load %arg3[%c0_108, %c0_109] : memref<128x128xbf16, #tpu.memory_space<vmem>>, vector<128x128xbf16>
    %cst_110 = arith.constant dense<0.000000e+00> : vector<8x128xf32>
    %129 = tpu.matmul %127, %128, %cst_110 {dimension_numbers = #tpu.dot_dimension_numbers<[1], [0], [0], [1], [0, 0, 1, 1], [], []>} : vector<8x128xbf16>, vector<128x128xbf16>, vector<8x128xf32> -> vector<8x128xf32>
    %130 = arith.addf %129, %116 : vector<8x128xf32>
    %131 = arith.addf %130, %2 : vector<8x128xf32>
    %132 = math.tanh %131 : vector<8x128xf32>
    %c0_111 = arith.constant 0 : index
    %c0_112 = arith.constant 0 : index
    %133 = vector.load %arg9[%c0_111, %c0_112] : memref<8x128xf32, #tpu.memory_space<vmem>>, vector<8x128xf32>
    tpu.vector_store %arg9[%c0_111, %c0_112], %126 {strides = array<i32>} : memref<8x128xf32, #tpu.memory_space<vmem>>, vector<8x128xf32>,
    %c0_113 = arith.constant 0 : index
    %c0_114 = arith.constant 0 : index
    %134 = vector.load %arg10[%c0_113, %c0_114] : memref<8x128xf32, #tpu.memory_space<vmem>>, vector<8x128xf32>
    tpu.vector_store %arg10[%c0_113, %c0_114], %132 {strides = array<i32>} : memref<8x128xf32, #tpu.memory_space<vmem>>, vector<8x128xf32>,
    %c0_115 = arith.constant 0 : index
    %c0_116 = arith.constant 0 : index
    %135 = vector.load %arg8[%c0_115, %c0_116] : memref<8x128xf32, #tpu.memory_space<vmem>>, vector<8x128xf32>
    %136 = arith.truncf %132 : vector<8x128xf32> to vector<8x128xbf16>
    %137 = arith.index_cast %c4_i32 : i32 to index
    %c0_117 = arith.constant 0 : index
    %c0_118 = arith.constant 0 : index
    %138 = vector.load %arg6[%137, %c0_117, %c0_118] : memref<8x128x128xbf16, #tpu.memory_space<vmem>>, vector<1x128x128xbf16>
    %139 = vector.shape_cast %138 : vector<1x128x128xbf16> to vector<128x128xbf16>
    %cst_119 = arith.constant dense<0.000000e+00> : vector<8x128xf32>
    %140 = tpu.matmul %136, %139, %cst_119 {dimension_numbers = #tpu.dot_dimension_numbers<[1], [0], [0], [1], [0, 0, 1, 1], [], []>} : vector<8x128xbf16>, vector<128x128xbf16>, vector<8x128xf32> -> vector<8x128xf32>
    %141 = arith.addf %135, %140 : vector<8x128xf32>
    %c0_120 = arith.constant 0 : index
    %c0_121 = arith.constant 0 : index
    %142 = vector.load %arg8[%c0_120, %c0_121] : memref<8x128xf32, #tpu.memory_space<vmem>>, vector<8x128xf32>
    tpu.vector_store %arg8[%c0_120, %c0_121], %141 {strides = array<i32>} : memref<8x128xf32, #tpu.memory_space<vmem>>, vector<8x128xf32>,
    %c5_i32 = arith.constant 5 : i32
    %c0_122 = arith.constant 0 : index
    %c0_123 = arith.constant 0 : index
    %143 = vector.load %arg10[%c0_122, %c0_123] : memref<8x128xf32, #tpu.memory_space<vmem>>, vector<8x128xf32>
    %144 = arith.truncf %143 : vector<8x128xf32> to vector<8x128xbf16>
    %c0_124 = arith.constant 0 : index
    %c0_125 = arith.constant 0 : index
    %145 = vector.load %arg4[%c0_124, %c0_125] : memref<128x128xbf16, #tpu.memory_space<vmem>>, vector<128x128xbf16>
    %cst_126 = arith.constant dense<0.000000e+00> : vector<8x128xf32>
    %146 = tpu.matmul %144, %145, %cst_126 {dimension_numbers = #tpu.dot_dimension_numbers<[1], [0], [0], [1], [0, 0, 1, 1], [], []>} : vector<8x128xbf16>, vector<128x128xbf16>, vector<8x128xf32> -> vector<8x128xf32>
    %147 = arith.index_cast %c5_i32 : i32 to index
    %c0_127 = arith.constant 0 : index
    %c0_128 = arith.constant 0 : index
    %148 = vector.load %arg1[%147, %c0_127, %c0_128] : memref<8x8x128xbf16, #tpu.memory_space<vmem>>, vector<1x8x128xbf16>
    %149 = vector.shape_cast %148 : vector<1x8x128xbf16> to vector<8x128xbf16>
    %150 = arith.extf %149 : vector<8x128xbf16> to vector<8x128xf32>
    %c0_129 = arith.constant 0 : index
    %c0_130 = arith.constant 0 : index
    %151 = vector.load %arg9[%c0_129, %c0_130] : memref<8x128xf32, #tpu.memory_space<vmem>>, vector<8x128xf32>
    %152 = arith.truncf %151 : vector<8x128xf32> to vector<8x128xbf16>
    %c0_131 = arith.constant 0 : index
    %c0_132 = arith.constant 0 : index
    %153 = vector.load %arg2[%c0_131, %c0_132] : memref<128x128xbf16, #tpu.memory_space<vmem>>, vector<128x128xbf16>
    %cst_133 = arith.constant dense<0.000000e+00> : vector<8x128xf32>
    %154 = tpu.matmul %152, %153, %cst_133 {dimension_numbers = #tpu.dot_dimension_numbers<[1], [0], [0], [1], [0, 0, 1, 1], [], []>} : vector<8x128xbf16>, vector<128x128xbf16>, vector<8x128xf32> -> vector<8x128xf32>
    %155 = arith.addf %150, %154 : vector<8x128xf32>
    %156 = math.tanh %155 : vector<8x128xf32>
    %157 = arith.truncf %156 : vector<8x128xf32> to vector<8x128xbf16>
    %c0_134 = arith.constant 0 : index
    %c0_135 = arith.constant 0 : index
    %158 = vector.load %arg3[%c0_134, %c0_135] : memref<128x128xbf16, #tpu.memory_space<vmem>>, vector<128x128xbf16>
    %cst_136 = arith.constant dense<0.000000e+00> : vector<8x128xf32>
    %159 = tpu.matmul %157, %158, %cst_136 {dimension_numbers = #tpu.dot_dimension_numbers<[1], [0], [0], [1], [0, 0, 1, 1], [], []>} : vector<8x128xbf16>, vector<128x128xbf16>, vector<8x128xf32> -> vector<8x128xf32>
    %160 = arith.addf %159, %146 : vector<8x128xf32>
    %161 = arith.addf %160, %2 : vector<8x128xf32>
    %162 = math.tanh %161 : vector<8x128xf32>
    %c0_137 = arith.constant 0 : index
    %c0_138 = arith.constant 0 : index
    %163 = vector.load %arg9[%c0_137, %c0_138] : memref<8x128xf32, #tpu.memory_space<vmem>>, vector<8x128xf32>
    tpu.vector_store %arg9[%c0_137, %c0_138], %156 {strides = array<i32>} : memref<8x128xf32, #tpu.memory_space<vmem>>, vector<8x128xf32>,
    %c0_139 = arith.constant 0 : index
    %c0_140 = arith.constant 0 : index
    %164 = vector.load %arg10[%c0_139, %c0_140] : memref<8x128xf32, #tpu.memory_space<vmem>>, vector<8x128xf32>
    tpu.vector_store %arg10[%c0_139, %c0_140], %162 {strides = array<i32>} : memref<8x128xf32, #tpu.memory_space<vmem>>, vector<8x128xf32>,
    %c0_141 = arith.constant 0 : index
    %c0_142 = arith.constant 0 : index
    %165 = vector.load %arg8[%c0_141, %c0_142] : memref<8x128xf32, #tpu.memory_space<vmem>>, vector<8x128xf32>
    %166 = arith.truncf %162 : vector<8x128xf32> to vector<8x128xbf16>
    %167 = arith.index_cast %c5_i32 : i32 to index
    %c0_143 = arith.constant 0 : index
    %c0_144 = arith.constant 0 : index
    %168 = vector.load %arg6[%167, %c0_143, %c0_144] : memref<8x128x128xbf16, #tpu.memory_space<vmem>>, vector<1x128x128xbf16>
    %169 = vector.shape_cast %168 : vector<1x128x128xbf16> to vector<128x128xbf16>
    %cst_145 = arith.constant dense<0.000000e+00> : vector<8x128xf32>
    %170 = tpu.matmul %166, %169, %cst_145 {dimension_numbers = #tpu.dot_dimension_numbers<[1], [0], [0], [1], [0, 0, 1, 1], [], []>} : vector<8x128xbf16>, vector<128x128xbf16>, vector<8x128xf32> -> vector<8x128xf32>
    %171 = arith.addf %165, %170 : vector<8x128xf32>
    %c0_146 = arith.constant 0 : index
    %c0_147 = arith.constant 0 : index
    %172 = vector.load %arg8[%c0_146, %c0_147] : memref<8x128xf32, #tpu.memory_space<vmem>>, vector<8x128xf32>
    tpu.vector_store %arg8[%c0_146, %c0_147], %171 {strides = array<i32>} : memref<8x128xf32, #tpu.memory_space<vmem>>, vector<8x128xf32>,
    %c6_i32 = arith.constant 6 : i32
    %c0_148 = arith.constant 0 : index
    %c0_149 = arith.constant 0 : index
    %173 = vector.load %arg10[%c0_148, %c0_149] : memref<8x128xf32, #tpu.memory_space<vmem>>, vector<8x128xf32>
    %174 = arith.truncf %173 : vector<8x128xf32> to vector<8x128xbf16>
    %c0_150 = arith.constant 0 : index
    %c0_151 = arith.constant 0 : index
    %175 = vector.load %arg4[%c0_150, %c0_151] : memref<128x128xbf16, #tpu.memory_space<vmem>>, vector<128x128xbf16>
    %cst_152 = arith.constant dense<0.000000e+00> : vector<8x128xf32>
    %176 = tpu.matmul %174, %175, %cst_152 {dimension_numbers = #tpu.dot_dimension_numbers<[1], [0], [0], [1], [0, 0, 1, 1], [], []>} : vector<8x128xbf16>, vector<128x128xbf16>, vector<8x128xf32> -> vector<8x128xf32>
    %177 = arith.index_cast %c6_i32 : i32 to index
    %c0_153 = arith.constant 0 : index
    %c0_154 = arith.constant 0 : index
    %178 = vector.load %arg1[%177, %c0_153, %c0_154] : memref<8x8x128xbf16, #tpu.memory_space<vmem>>, vector<1x8x128xbf16>
    %179 = vector.shape_cast %178 : vector<1x8x128xbf16> to vector<8x128xbf16>
    %180 = arith.extf %179 : vector<8x128xbf16> to vector<8x128xf32>
    %c0_155 = arith.constant 0 : index
    %c0_156 = arith.constant 0 : index
    %181 = vector.load %arg9[%c0_155, %c0_156] : memref<8x128xf32, #tpu.memory_space<vmem>>, vector<8x128xf32>
    %182 = arith.truncf %181 : vector<8x128xf32> to vector<8x128xbf16>
    %c0_157 = arith.constant 0 : index
    %c0_158 = arith.constant 0 : index
    %183 = vector.load %arg2[%c0_157, %c0_158] : memref<128x128xbf16, #tpu.memory_space<vmem>>, vector<128x128xbf16>
    %cst_159 = arith.constant dense<0.000000e+00> : vector<8x128xf32>
    %184 = tpu.matmul %182, %183, %cst_159 {dimension_numbers = #tpu.dot_dimension_numbers<[1], [0], [0], [1], [0, 0, 1, 1], [], []>} : vector<8x128xbf16>, vector<128x128xbf16>, vector<8x128xf32> -> vector<8x128xf32>
    %185 = arith.addf %180, %184 : vector<8x128xf32>
    %186 = math.tanh %185 : vector<8x128xf32>
    %187 = arith.truncf %186 : vector<8x128xf32> to vector<8x128xbf16>
    %c0_160 = arith.constant 0 : index
    %c0_161 = arith.constant 0 : index
    %188 = vector.load %arg3[%c0_160, %c0_161] : memref<128x128xbf16, #tpu.memory_space<vmem>>, vector<128x128xbf16>
    %cst_162 = arith.constant dense<0.000000e+00> : vector<8x128xf32>
    %189 = tpu.matmul %187, %188, %cst_162 {dimension_numbers = #tpu.dot_dimension_numbers<[1], [0], [0], [1], [0, 0, 1, 1], [], []>} : vector<8x128xbf16>, vector<128x128xbf16>, vector<8x128xf32> -> vector<8x128xf32>
    %190 = arith.addf %189, %176 : vector<8x128xf32>
    %191 = arith.addf %190, %2 : vector<8x128xf32>
    %192 = math.tanh %191 : vector<8x128xf32>
    %c0_163 = arith.constant 0 : index
    %c0_164 = arith.constant 0 : index
    %193 = vector.load %arg9[%c0_163, %c0_164] : memref<8x128xf32, #tpu.memory_space<vmem>>, vector<8x128xf32>
    tpu.vector_store %arg9[%c0_163, %c0_164], %186 {strides = array<i32>} : memref<8x128xf32, #tpu.memory_space<vmem>>, vector<8x128xf32>,
    %c0_165 = arith.constant 0 : index
    %c0_166 = arith.constant 0 : index
    %194 = vector.load %arg10[%c0_165, %c0_166] : memref<8x128xf32, #tpu.memory_space<vmem>>, vector<8x128xf32>
    tpu.vector_store %arg10[%c0_165, %c0_166], %192 {strides = array<i32>} : memref<8x128xf32, #tpu.memory_space<vmem>>, vector<8x128xf32>,
    %c0_167 = arith.constant 0 : index
    %c0_168 = arith.constant 0 : index
    %195 = vector.load %arg8[%c0_167, %c0_168] : memref<8x128xf32, #tpu.memory_space<vmem>>, vector<8x128xf32>
    %196 = arith.truncf %192 : vector<8x128xf32> to vector<8x128xbf16>
    %197 = arith.index_cast %c6_i32 : i32 to index
    %c0_169 = arith.constant 0 : index
    %c0_170 = arith.constant 0 : index
    %198 = vector.load %arg6[%197, %c0_169, %c0_170] : memref<8x128x128xbf16, #tpu.memory_space<vmem>>, vector<1x128x128xbf16>
    %199 = vector.shape_cast %198 : vector<1x128x128xbf16> to vector<128x128xbf16>
    %cst_171 = arith.constant dense<0.000000e+00> : vector<8x128xf32>
    %200 = tpu.matmul %196, %199, %cst_171 {dimension_numbers = #tpu.dot_dimension_numbers<[1], [0], [0], [1], [0, 0, 1, 1], [], []>} : vector<8x128xbf16>, vector<128x128xbf16>, vector<8x128xf32> -> vector<8x128xf32>
    %201 = arith.addf %195, %200 : vector<8x128xf32>
    %c0_172 = arith.constant 0 : index
    %c0_173 = arith.constant 0 : index
    %202 = vector.load %arg8[%c0_172, %c0_173] : memref<8x128xf32, #tpu.memory_space<vmem>>, vector<8x128xf32>
    tpu.vector_store %arg8[%c0_172, %c0_173], %201 {strides = array<i32>} : memref<8x128xf32, #tpu.memory_space<vmem>>, vector<8x128xf32>,
    %c7_i32 = arith.constant 7 : i32
    %c0_174 = arith.constant 0 : index
    %c0_175 = arith.constant 0 : index
    %203 = vector.load %arg10[%c0_174, %c0_175] : memref<8x128xf32, #tpu.memory_space<vmem>>, vector<8x128xf32>
    %204 = arith.truncf %203 : vector<8x128xf32> to vector<8x128xbf16>
    %c0_176 = arith.constant 0 : index
    %c0_177 = arith.constant 0 : index
    %205 = vector.load %arg4[%c0_176, %c0_177] : memref<128x128xbf16, #tpu.memory_space<vmem>>, vector<128x128xbf16>
    %cst_178 = arith.constant dense<0.000000e+00> : vector<8x128xf32>
    %206 = tpu.matmul %204, %205, %cst_178 {dimension_numbers = #tpu.dot_dimension_numbers<[1], [0], [0], [1], [0, 0, 1, 1], [], []>} : vector<8x128xbf16>, vector<128x128xbf16>, vector<8x128xf32> -> vector<8x128xf32>
    %207 = arith.index_cast %c7_i32 : i32 to index
    %c0_179 = arith.constant 0 : index
    %c0_180 = arith.constant 0 : index
    %208 = vector.load %arg1[%207, %c0_179, %c0_180] : memref<8x8x128xbf16, #tpu.memory_space<vmem>>, vector<1x8x128xbf16>
    %209 = vector.shape_cast %208 : vector<1x8x128xbf16> to vector<8x128xbf16>
    %210 = arith.extf %209 : vector<8x128xbf16> to vector<8x128xf32>
    %c0_181 = arith.constant 0 : index
    %c0_182 = arith.constant 0 : index
    %211 = vector.load %arg9[%c0_181, %c0_182] : memref<8x128xf32, #tpu.memory_space<vmem>>, vector<8x128xf32>
    %212 = arith.truncf %211 : vector<8x128xf32> to vector<8x128xbf16>
    %c0_183 = arith.constant 0 : index
    %c0_184 = arith.constant 0 : index
    %213 = vector.load %arg2[%c0_183, %c0_184] : memref<128x128xbf16, #tpu.memory_space<vmem>>, vector<128x128xbf16>
    %cst_185 = arith.constant dense<0.000000e+00> : vector<8x128xf32>
    %214 = tpu.matmul %212, %213, %cst_185 {dimension_numbers = #tpu.dot_dimension_numbers<[1], [0], [0], [1], [0, 0, 1, 1], [], []>} : vector<8x128xbf16>, vector<128x128xbf16>, vector<8x128xf32> -> vector<8x128xf32>
    %215 = arith.addf %210, %214 : vector<8x128xf32>
    %216 = math.tanh %215 : vector<8x128xf32>
    %217 = arith.truncf %216 : vector<8x128xf32> to vector<8x128xbf16>
    %c0_186 = arith.constant 0 : index
    %c0_187 = arith.constant 0 : index
    %218 = vector.load %arg3[%c0_186, %c0_187] : memref<128x128xbf16, #tpu.memory_space<vmem>>, vector<128x128xbf16>
    %cst_188 = arith.constant dense<0.000000e+00> : vector<8x128xf32>
    %219 = tpu.matmul %217, %218, %cst_188 {dimension_numbers = #tpu.dot_dimension_numbers<[1], [0], [0], [1], [0, 0, 1, 1], [], []>} : vector<8x128xbf16>, vector<128x128xbf16>, vector<8x128xf32> -> vector<8x128xf32>
    %220 = arith.addf %219, %206 : vector<8x128xf32>
    %221 = arith.addf %220, %2 : vector<8x128xf32>
    %222 = math.tanh %221 : vector<8x128xf32>
    %c0_189 = arith.constant 0 : index
    %c0_190 = arith.constant 0 : index
    %223 = vector.load %arg9[%c0_189, %c0_190] : memref<8x128xf32, #tpu.memory_space<vmem>>, vector<8x128xf32>
    tpu.vector_store %arg9[%c0_189, %c0_190], %216 {strides = array<i32>} : memref<8x128xf32, #tpu.memory_space<vmem>>, vector<8x128xf32>,
    %c0_191 = arith.constant 0 : index
    %c0_192 = arith.constant 0 : index
    %224 = vector.load %arg10[%c0_191, %c0_192] : memref<8x128xf32, #tpu.memory_space<vmem>>, vector<8x128xf32>
    tpu.vector_store %arg10[%c0_191, %c0_192], %222 {strides = array<i32>} : memref<8x128xf32, #tpu.memory_space<vmem>>, vector<8x128xf32>,
    %c0_193 = arith.constant 0 : index
    %c0_194 = arith.constant 0 : index
    %225 = vector.load %arg8[%c0_193, %c0_194] : memref<8x128xf32, #tpu.memory_space<vmem>>, vector<8x128xf32>
    %226 = arith.truncf %222 : vector<8x128xf32> to vector<8x128xbf16>
    %227 = arith.index_cast %c7_i32 : i32 to index
    %c0_195 = arith.constant 0 : index
    %c0_196 = arith.constant 0 : index
    %228 = vector.load %arg6[%227, %c0_195, %c0_196] : memref<8x128x128xbf16, #tpu.memory_space<vmem>>, vector<1x128x128xbf16>
    %229 = vector.shape_cast %228 : vector<1x128x128xbf16> to vector<128x128xbf16>
    %cst_197 = arith.constant dense<0.000000e+00> : vector<8x128xf32>
    %230 = tpu.matmul %226, %229, %cst_197 {dimension_numbers = #tpu.dot_dimension_numbers<[1], [0], [0], [1], [0, 0, 1, 1], [], []>} : vector<8x128xbf16>, vector<128x128xbf16>, vector<8x128xf32> -> vector<8x128xf32>
    %231 = arith.addf %225, %230 : vector<8x128xf32>
    %c0_198 = arith.constant 0 : index
    %c0_199 = arith.constant 0 : index
    %232 = vector.load %arg8[%c0_198, %c0_199] : memref<8x128xf32, #tpu.memory_space<vmem>>, vector<8x128xf32>
    tpu.vector_store %arg8[%c0_198, %c0_199], %231 {strides = array<i32>} : memref<8x128xf32, #tpu.memory_space<vmem>>, vector<8x128xf32>,
    %c7_i32_200 = arith.constant 7 : i32
    return
  }
  func.func @transform_0(%arg0: i32) -> (i32, i32, i32) {
    %c0_i32 = arith.constant 0 : i32
    %c0_i32_0 = arith.constant 0 : i32
    %c0_i32_1 = arith.constant 0 : i32
    return %c0_i32, %arg0, %c0_i32_0 : i32, i32, i32
  }
  func.func @transform_1(%arg0: i32) -> (i32, i32) {
    %c0_i32 = arith.constant 0 : i32
    %c0_i32_0 = arith.constant 0 : i32
    %c0_i32_1 = arith.constant 0 : i32
    return %c0_i32, %c0_i32_0 : i32, i32
  }
  func.func @transform_2(%arg0: i32) -> (i32, i32) {
    %c0_i32 = arith.constant 0 : i32
    %c0_i32_0 = arith.constant 0 : i32
    %c0_i32_1 = arith.constant 0 : i32
    return %c0_i32, %c0_i32_0 : i32, i32
  }
  func.func @transform_3(%arg0: i32) -> (i32, i32) {
    %c0_i32 = arith.constant 0 : i32
    %c0_i32_0 = arith.constant 0 : i32
    %c0_i32_1 = arith.constant 0 : i32
    return %c0_i32, %c0_i32_0 : i32, i32
  }
  func.func @transform_4(%arg0: i32) -> (i32, i32) {
    %c0_i32 = arith.constant 0 : i32
    %c0_i32_0 = arith.constant 0 : i32
    %c0_i32_1 = arith.constant 0 : i32
    return %c0_i32, %c0_i32_0 : i32, i32
  }
  func.func @transform_5(%arg0: i32) -> (i32, i32, i32) {
    %c0_i32 = arith.constant 0 : i32
    %c0_i32_0 = arith.constant 0 : i32
    %c0_i32_1 = arith.constant 0 : i32
    %c0_i32_2 = arith.constant 0 : i32
    return %c0_i32, %c0_i32_0, %c0_i32_1 : i32, i32, i32
  }
  func.func @transform_6(%arg0: i32) -> (i32, i32) {
    %c0_i32 = arith.constant 0 : i32
    %c0_i32_0 = arith.constant 0 : i32
    %c0_i32_1 = arith.constant 0 : i32
    return %c0_i32, %c0_i32_0 : i32, i32
  }
  func.func @transform_7(%arg0: i32) -> (i32, i32) {
    %c0_i32 = arith.constant 0 : i32
    %c0_i32_0 = arith.constant 0 : i32
    return %arg0, %c0_i32 : i32, i32
  }
}

</mosaic_0001>

<llo_original>
// kernel: rnn_forward.1
$region0: #{rnn_forward.1}
  #allocation0 [shape = 'u32[]', space=smem, size = 0x4, offset = 0x4, fixed_abs, tag = 'smem constant byte address 0x4 - core index']
  #allocation1 [shape = 'u32[72,128]{1,0:T(1,128)}', space=vmem, size = 0x9000, scoped, tag = 'internal scratch']
  #allocation2 [shape = 'f32[8,128]{1,0:T(8,128)}', space=vmem, size = 0x1000, scoped, tag = 'scratch operand']
  #allocation3 [shape = 'f32[8,128]{1,0:T(8,128)}', space=vmem, size = 0x1000, scoped, tag = 'scratch operand']
  %s0 = inlined_call_operand.vmem [shape: bf16[8,8,128], index: 0, kind: input, shape index: {}]
  %s1 = inlined_call_operand.vmem [shape: bf16[128,128], index: 1, kind: input, shape index: {}]
  %s2 = inlined_call_operand.vmem [shape: bf16[128,128], index: 2, kind: input, shape index: {}]
  %s3 = inlined_call_operand.vmem [shape: bf16[128,128], index: 3, kind: input, shape index: {}]
  %s4 = inlined_call_operand.vmem [shape: f32[1,128], index: 4, kind: input, shape index: {}]
  %s5 = inlined_call_operand.vmem [shape: bf16[8,128,128], index: 5, kind: input, shape index: {}]
  %s6 = inlined_call_operand.vmem [shape: f32[1,128], index: 6, kind: input, shape index: {}]
  %s7 = inlined_call_operand.vmem [shape: f32[8,128], index: 7, kind: output, shape index: {}]
  %s8 = sld [smem:[#allocation0]]
  $region38: #{rnn_forward.1} parent=0
    _
  %s10 = ssub.s32 1, %s8
  %s11 = scalar_select 0, %s10, %s8
  // Predicated region
  $region2: #{rnn_forward.1} parent=0 // pred_check
    _
  $region3: #{rnn_forward.1} parent=0 // pred_check_branch
    %13 = sbr.rel (0) target = $region5
  $region4: #{rnn_forward.1} parent=0 // pred_region
    _
  $region5: #{rnn_forward.1} parent=0 // pred_fallthru
    _
  // Predicated region
  $region6: #{rnn_forward.1} parent=0 // pred_check
    _
  $region7: #{rnn_forward.1} parent=0 // pred_check_branch
    %15 = sbr.rel (0) target = $region9
  $region8: #{rnn_forward.1} parent=0 // pred_region
    _
  $region9: #{rnn_forward.1} parent=0 // pred_fallthru
    _
  // Predicated region
  $region10: #{rnn_forward.1} parent=0 // pred_check
    _
  $region11: #{rnn_forward.1} parent=0 // pred_check_branch
    %17 = sbr.rel (0) target = $region13
  $region12: #{rnn_forward.1} parent=0 // pred_region
    _
  $region13: #{rnn_forward.1} parent=0 // pred_fallthru
    _
  // Predicated region
  $region14: #{rnn_forward.1} parent=0 // pred_check
    _
  $region15: #{rnn_forward.1} parent=0 // pred_check_branch
    %19 = sbr.rel (0) target = $region17
  $region16: #{rnn_forward.1} parent=0 // pred_region
    _
  $region17: #{rnn_forward.1} parent=0 // pred_fallthru
    _
  // Predicated region
  $region18: #{rnn_forward.1} parent=0 // pred_check
    _
  $region19: #{rnn_forward.1} parent=0 // pred_check_branch
    %21 = sbr.rel (0) target = $region21
  $region20: #{rnn_forward.1} parent=0 // pred_region
    _
  $region21: #{rnn_forward.1} parent=0 // pred_fallthru
    _
  // Predicated region
  $region22: #{rnn_forward.1} parent=0 // pred_check
    _
  $region23: #{rnn_forward.1} parent=0 // pred_check_branch
    %23 = sbr.rel (0) target = $region25
  $region24: #{rnn_forward.1} parent=0 // pred_region
    _
  $region25: #{rnn_forward.1} parent=0 // pred_fallthru
    _
  // Predicated region
  $region26: #{rnn_forward.1} parent=0 // pred_check
    _
  $region27: #{rnn_forward.1} parent=0 // pred_check_branch
    %25 = sbr.rel (0) target = $region29
  $region28: #{rnn_forward.1} parent=0 // pred_region
    _
  $region29: #{rnn_forward.1} parent=0 // pred_fallthru
    _
  %v26 = vld [vmem:[%s4] sm:$0x1]
  %v28 = vperm.slane %v26, 0
  %v30 = vld [vmem:[%s0] sm:$0xf]
  %v31 = vunpack.c.l.bf16 %v30
  %v32 = vtanh.pop %v31
  %v33 = vpack.c.bf16 %v32, %v32
  %v34 = vld [vmem:[%s2] sm:$0xf]
  %v35 = vld [vmem:[%s2 + $0x4] sm:$0xf]
  %v36 = vld [vmem:[%s2 + $0x8] sm:$0xf]
  %v37 = vld [vmem:[%s2 + $0xc] sm:$0xf]
  %v38 = vld [vmem:[%s2 + $0x10] sm:$0xf]
  %v39 = vld [vmem:[%s2 + $0x14] sm:$0xf]
  %v40 = vld [vmem:[%s2 + $0x18] sm:$0xf]
  %v41 = vld [vmem:[%s2 + $0x1c] sm:$0xf]
  %v42 = vld [vmem:[%s2 + $0x20] sm:$0xf]
  %v43 = vld [vmem:[%s2 + $0x24] sm:$0xf]
  %v44 = vld [vmem:[%s2 + $0x28] sm:$0xf]
  %v45 = vld [vmem:[%s2 + $0x2c] sm:$0xf]
  %v46 = vld [vmem:[%s2 + $0x30] sm:$0xf]
  %v47 = vld [vmem:[%s2 + $0x34] sm:$0xf]
  %v48 = vld [vmem:[%s2 + $0x38] sm:$0xf]
  %v49 = vld [vmem:[%s2 + $0x3c] sm:$0xf]
  %v66 = vunpack.c.l.b16 %v34
  %v67 = vunpack.c.l.b16 %v35
  %v68 = vunpack.c.l.b16 %v36
  %v69 = vunpack.c.l.b16 %v37
  %v70 = vunpack.c.l.b16 %v38
  %v71 = vunpack.c.l.b16 %v39
  %v72 = vunpack.c.l.b16 %v40
  %v73 = vunpack.c.l.b16 %v41
  %v74 = vunpack.c.l.b16 %v42
  %v75 = vunpack.c.l.b16 %v43
  %v76 = vunpack.c.l.b16 %v44
  %v77 = vunpack.c.l.b16 %v45
  %v78 = vunpack.c.l.b16 %v46
  %v79 = vunpack.c.l.b16 %v47
  %v80 = vunpack.c.l.b16 %v48
  %v81 = vunpack.c.l.b16 %v49
  %v82 = vpack.c.b16 %v67, %v66
  %v83 = vpack.c.b16 %v69, %v68
  %v84 = vpack.c.b16 %v71, %v70
  %v85 = vpack.c.b16 %v73, %v72
  %v86 = vpack.c.b16 %v75, %v74
  %v87 = vpack.c.b16 %v77, %v76
  %v88 = vpack.c.b16 %v79, %v78
  %v89 = vpack.c.b16 %v81, %v80
  %98 = vmatpush.bf16.msra.mxu0 %v89
  %99 = vmatpush.bf16.msra.mxu0 %v88
  %100 = vmatpush.bf16.msra.mxu0 %v87
  %101 = vmatpush.bf16.msra.mxu0 %v86
  %102 = vmatpush.bf16.msra.mxu0 %v85
  %103 = vmatpush.bf16.msra.mxu0 %v84
  %104 = vmatpush.bf16.msra.mxu0 %v83
  %105 = vmatpush.bf16.msra.mxu0 %v82
  %106 = vmatmul.bf16.gmra.mxu0 %v33
  %v107 = vpop.f32.mrf.mxu0
  %v108 = vadd.f32 %v28, %v107
  %v109 = vpop.f32.mrf.mxu0
  %110 = vdwg.mxu0
  %v111 = vtanh.pop %v108
  %112 = vst [vmem:[#allocation2] sm:$0xff] %v32
  %113 = vst [vmem:[#allocation3] sm:$0xff] %v111
  %v114 = vld [vmem:[%s6] sm:$0x1]
  %v116 = vperm.slane %v114, 0
  %v118 = vpack.c.bf16 %v111, %v111
  %v119 = vld [vmem:[%s5] sm:$0xf]
  %v120 = vld [vmem:[%s5 + $0x4] sm:$0xf]
  %v121 = vld [vmem:[%s5 + $0x8] sm:$0xf]
  %v122 = vld [vmem:[%s5 + $0xc] sm:$0xf]
  %v123 = vld [vmem:[%s5 + $0x10] sm:$0xf]
  %v124 = vld [vmem:[%s5 + $0x14] sm:$0xf]
  %v125 = vld [vmem:[%s5 + $0x18] sm:$0xf]
  %v126 = vld [vmem:[%s5 + $0x1c] sm:$0xf]
  %v127 = vld [vmem:[%s5 + $0x20] sm:$0xf]
  %v128 = vld [vmem:[%s5 + $0x24] sm:$0xf]
  %v129 = vld [vmem:[%s5 + $0x28] sm:$0xf]
  %v130 = vld [vmem:[%s5 + $0x2c] sm:$0xf]
  %v131 = vld [vmem:[%s5 + $0x30] sm:$0xf]
  %v132 = vld [vmem:[%s5 + $0x34] sm:$0xf]
  %v133 = vld [vmem:[%s5 + $0x38] sm:$0xf]
  %v134 = vld [vmem:[%s5 + $0x3c] sm:$0xf]
  %v151 = vunpack.c.l.b16 %v119
  %v152 = vunpack.c.l.b16 %v120
  %v153 = vunpack.c.l.b16 %v121
  %v154 = vunpack.c.l.b16 %v122
  %v155 = vunpack.c.l.b16 %v123
  %v156 = vunpack.c.l.b16 %v124
  %v157 = vunpack.c.l.b16 %v125
  %v158 = vunpack.c.l.b16 %v126
  %v159 = vunpack.c.l.b16 %v127
  %v160 = vunpack.c.l.b16 %v128
  %v161 = vunpack.c.l.b16 %v129
  %v162 = vunpack.c.l.b16 %v130
  %v163 = vunpack.c.l.b16 %v131
  %v164 = vunpack.c.l.b16 %v132
  %v165 = vunpack.c.l.b16 %v133
  %v166 = vunpack.c.l.b16 %v134
  %v167 = vpack.c.b16 %v152, %v151
  %v168 = vpack.c.b16 %v154, %v153
  %v169 = vpack.c.b16 %v156, %v155
  %v170 = vpack.c.b16 %v158, %v157
  %v171 = vpack.c.b16 %v160, %v159
  %v172 = vpack.c.b16 %v162, %v161
  %v173 = vpack.c.b16 %v164, %v163
  %v174 = vpack.c.b16 %v166, %v165
  %183 = vmatpush.bf16.msra.mxu0 %v174
  %184 = vmatpush.bf16.msra.mxu0 %v173
  %185 = vmatpush.bf16.msra.mxu0 %v172
  %186 = vmatpush.bf16.msra.mxu0 %v171
  %187 = vmatpush.bf16.msra.mxu0 %v170
  %188 = vmatpush.bf16.msra.mxu0 %v169
  %189 = vmatpush.bf16.msra.mxu0 %v168
  %190 = vmatpush.bf16.msra.mxu0 %v167
  %191 = vmatmul.bf16.gmra.mxu0 %v118
  %v192 = vpop.f32.mrf.mxu0
  %v193 = vadd.f32 0.0, %v192
  %v194 = vpop.f32.mrf.mxu0
  %195 = vdwg.mxu0
  %v196 = vadd.f32 %v116, %v193
  %197 = vst [vmem:[%s7] sm:$0xff] %v196
  %v198 = vld [vmem:[#allocation3] sm:$0xff]
  %v199 = vpack.c.bf16 %v198, %v198
  %v200 = vld [vmem:[%s3] sm:$0xf]
  %v201 = vld [vmem:[%s3 + $0x4] sm:$0xf]
  %v202 = vld [vmem:[%s3 + $0x8] sm:$0xf]
  %v203 = vld [vmem:[%s3 + $0xc] sm:$0xf]
  %v204 = vld [vmem:[%s3 + $0x10] sm:$0xf]
  %v205 = vld [vmem:[%s3 + $0x14] sm:$0xf]
  %v206 = vld [vmem:[%s3 + $0x18] sm:$0xf]
  %v207 = vld [vmem:[%s3 + $0x1c] sm:$0xf]
  %v208 = vld [vmem:[%s3 + $0x20] sm:$0xf]
  %v209 = vld [vmem:[%s3 + $0x24] sm:$0xf]
  %v210 = vld [vmem:[%s3 + $0x28] sm:$0xf]
  %v211 = vld [vmem:[%s3 + $0x2c] sm:$0xf]
  %v212 = vld [vmem:[%s3 + $0x30] sm:$0xf]
  %v213 = vld [vmem:[%s3 + $0x34] sm:$0xf]
  %v214 = vld [vmem:[%s3 + $0x38] sm:$0xf]
  %v215 = vld [vmem:[%s3 + $0x3c] sm:$0xf]
  %v232 = vunpack.c.l.b16 %v200
  %v233 = vunpack.c.l.b16 %v201
  %v234 = vunpack.c.l.b16 %v202
  %v235 = vunpack.c.l.b16 %v203
  %v236 = vunpack.c.l.b16 %v204
  %v237 = vunpack.c.l.b16 %v205
  %v238 = vunpack.c.l.b16 %v206
  %v239 = vunpack.c.l.b16 %v207
  %v240 = vunpack.c.l.b16 %v208
  %v241 = vunpack.c.l.b16 %v209
  %v242 = vunpack.c.l.b16 %v210
  %v243 = vunpack.c.l.b16 %v211
  %v244 = vunpack.c.l.b16 %v212
  %v245 = vunpack.c.l.b16 %v213
  %v246 = vunpack.c.l.b16 %v214
  %v247 = vunpack.c.l.b16 %v215
  %v248 = vpack.c.b16 %v233, %v232
  %v249 = vpack.c.b16 %v235, %v234
  %v250 = vpack.c.b16 %v237, %v236
  %v251 = vpack.c.b16 %v239, %v238
  %v252 = vpack.c.b16 %v241, %v240
  %v253 = vpack.c.b16 %v243, %v242
  %v254 = vpack.c.b16 %v245, %v244
  %v255 = vpack.c.b16 %v247, %v246
  %264 = vmatpush.bf16.msra.mxu0 %v255
  %265 = vmatpush.bf16.msra.mxu0 %v254
  %266 = vmatpush.bf16.msra.mxu0 %v253
  %267 = vmatpush.bf16.msra.mxu0 %v252
  %268 = vmatpush.bf16.msra.mxu0 %v251
  %269 = vmatpush.bf16.msra.mxu0 %v250
  %270 = vmatpush.bf16.msra.mxu0 %v249
  %271 = vmatpush.bf16.msra.mxu0 %v248
  %272 = vmatmul.bf16.gmra.mxu0 %v199
  %v273 = vpop.f32.mrf.mxu0
  %v274 = vadd.f32 0.0, %v273
  %v275 = vpop.f32.mrf.mxu0
  %276 = vdwg.mxu0
  %s277 = scalar_lea.vmem %s0, 4
  %v278 = vld [vmem:[%s277] sm:$0xf]
  %v279 = vunpack.c.l.bf16 %v278
  %v280 = vld [vmem:[#allocation2] sm:$0xff]
  %v281 = vpack.c.bf16 %v280, %v280
  %v282 = vld [vmem:[%s1] sm:$0xf]
  %v283 = vld [vmem:[%s1 + $0x4] sm:$0xf]
  %v284 = vld [vmem:[%s1 + $0x8] sm:$0xf]
  %v285 = vld [vmem:[%s1 + $0xc] sm:$0xf]
  %v286 = vld [vmem:[%s1 + $0x10] sm:$0xf]
  %v287 = vld [vmem:[%s1 + $0x14] sm:$0xf]
  %v288 = vld [vmem:[%s1 + $0x18] sm:$0xf]
  %v289 = vld [vmem:[%s1 + $0x1c] sm:$0xf]
  %v290 = vld [vmem:[%s1 + $0x20] sm:$0xf]
  %v291 = vld [vmem:[%s1 + $0x24] sm:$0xf]
  %v292 = vld [vmem:[%s1 + $0x28] sm:$0xf]
  %v293 = vld [vmem:[%s1 + $0x2c] sm:$0xf]
  %v294 = vld [vmem:[%s1 + $0x30] sm:$0xf]
  %v295 = vld [vmem:[%s1 + $0x34] sm:$0xf]
  %v296 = vld [vmem:[%s1 + $0x38] sm:$0xf]
  %v297 = vld [vmem:[%s1 + $0x3c] sm:$0xf]
  %v314 = vunpack.c.l.b16 %v282
  %v315 = vunpack.c.l.b16 %v283
  %v316 = vunpack.c.l.b16 %v284
  %v317 = vunpack.c.l.b16 %v285
  %v318 = vunpack.c.l.b16 %v286
  %v319 = vunpack.c.l.b16 %v287
  %v320 = vunpack.c.l.b16 %v288
  %v321 = vunpack.c.l.b16 %v289
  %v322 = vunpack.c.l.b16 %v290
  %v323 = vunpack.c.l.b16 %v291
  %v324 = vunpack.c.l.b16 %v292
  %v325 = vunpack.c.l.b16 %v293
  %v326 = vunpack.c.l.b16 %v294
  %v327 = vunpack.c.l.b16 %v295
  %v328 = vunpack.c.l.b16 %v296
  %v329 = vunpack.c.l.b16 %v297
  %v330 = vpack.c.b16 %v315, %v314
  %v331 = vpack.c.b16 %v317, %v316
  %v332 = vpack.c.b16 %v319, %v318
  %v333 = vpack.c.b16 %v321, %v320
  %v334 = vpack.c.b16 %v323, %v322
  %v335 = vpack.c.b16 %v325, %v324
  %v336 = vpack.c.b16 %v327, %v326
  %v337 = vpack.c.b16 %v329, %v328
  %346 = vmatpush.bf16.msra.mxu0 %v337
  %347 = vmatpush.bf16.msra.mxu0 %v336
  %348 = vmatpush.bf16.msra.mxu0 %v335
  %349 = vmatpush.bf16.msra.mxu0 %v334
  %350 = vmatpush.bf16.msra.mxu0 %v333
  %351 = vmatpush.bf16.msra.mxu0 %v332
  %352 = vmatpush.bf16.msra.mxu0 %v331
  %353 = vmatpush.bf16.msra.mxu0 %v330
  %354 = vmatmul.bf16.gmra.mxu0 %v281
  %v355 = vpop.f32.mrf.mxu0
  %v356 = vadd.f32 0.0, %v355
  %v357 = vpop.f32.mrf.mxu0
  %358 = vdwg.mxu0
  %v359 = vadd.f32 %v279, %v356
  %v360 = vtanh.pop %v359
  %v361 = vpack.c.bf16 %v360, %v360
  %v362 = vld [vmem:[%s2] sm:$0xf]
  %v363 = vld [vmem:[%s2 + $0x4] sm:$0xf]
  %v364 = vld [vmem:[%s2 + $0x8] sm:$0xf]
  %v365 = vld [vmem:[%s2 + $0xc] sm:$0xf]
  %v366 = vld [vmem:[%s2 + $0x10] sm:$0xf]
  %v367 = vld [vmem:[%s2 + $0x14] sm:$0xf]
  %v368 = vld [vmem:[%s2 + $0x18] sm:$0xf]
  %v369 = vld [vmem:[%s2 + $0x1c] sm:$0xf]
  %v370 = vld [vmem:[%s2 + $0x20] sm:$0xf]
  %v371 = vld [vmem:[%s2 + $0x24] sm:$0xf]
  %v372 = vld [vmem:[%s2 + $0x28] sm:$0xf]
  %v373 = vld [vmem:[%s2 + $0x2c] sm:$0xf]
  %v374 = vld [vmem:[%s2 + $0x30] sm:$0xf]
  %v375 = vld [vmem:[%s2 + $0x34] sm:$0xf]
  %v376 = vld [vmem:[%s2 + $0x38] sm:$0xf]
  %v377 = vld [vmem:[%s2 + $0x3c] sm:$0xf]
  %v394 = vunpack.c.l.b16 %v362
  %v395 = vunpack.c.l.b16 %v363
  %v396 = vunpack.c.l.b16 %v364
  %v397 = vunpack.c.l.b16 %v365
  %v398 = vunpack.c.l.b16 %v366
  %v399 = vunpack.c.l.b16 %v367
  %v400 = vunpack.c.l.b16 %v368
  %v401 = vunpack.c.l.b16 %v369
  %v402 = vunpack.c.l.b16 %v370
  %v403 = vunpack.c.l.b16 %v371
  %v404 = vunpack.c.l.b16 %v372
  %v405 = vunpack.c.l.b16 %v373
  %v406 = vunpack.c.l.b16 %v374
  %v407 = vunpack.c.l.b16 %v375
  %v408 = vunpack.c.l.b16 %v376
  %v409 = vunpack.c.l.b16 %v377
  %v410 = vpack.c.b16 %v395, %v394
  %v411 = vpack.c.b16 %v397, %v396
  %v412 = vpack.c.b16 %v399, %v398
  %v413 = vpack.c.b16 %v401, %v400
  %v414 = vpack.c.b16 %v403, %v402
  %v415 = vpack.c.b16 %v405, %v404
  %v416 = vpack.c.b16 %v407, %v406
  %v417 = vpack.c.b16 %v409, %v408
  %426 = vmatpush.bf16.msra.mxu0 %v417
  %427 = vmatpush.bf16.msra.mxu0 %v416
  %428 = vmatpush.bf16.msra.mxu0 %v415
  %429 = vmatpush.bf16.msra.mxu0 %v414
  %430 = vmatpush.bf16.msra.mxu0 %v413
  %431 = vmatpush.bf16.msra.mxu0 %v412
  %432 = vmatpush.bf16.msra.mxu0 %v411
  %433 = vmatpush.bf16.msra.mxu0 %v410
  %434 = vmatmul.bf16.gmra.mxu0 %v361
  %v435 = vpop.f32.mrf.mxu0
  %v436 = vadd.f32 %v274, %v435
  %v437 = vpop.f32.mrf.mxu0
  %438 = vdwg.mxu0
  %v439 = vadd.f32 %v436, %v28
  %v440 = vtanh.pop %v439
  %441 = vst [vmem:[#allocation2] sm:$0xff] %v360
  %442 = vst [vmem:[#allocation3] sm:$0xff] %v440
  %v443 = vld [vmem:[%s7] sm:$0xff]
  %v444 = vpack.c.bf16 %v440, %v440
  %s445 = scalar_lea.vmem %s5, 64
  %v446 = vld [vmem:[%s445] sm:$0xf]
  %v447 = vld [vmem:[%s445 + $0x4] sm:$0xf]
  %v448 = vld [vmem:[%s445 + $0x8] sm:$0xf]
  %v449 = vld [vmem:[%s445 + $0xc] sm:$0xf]
  %v450 = vld [vmem:[%s445 + $0x10] sm:$0xf]
  %v451 = vld [vmem:[%s445 + $0x14] sm:$0xf]
  %v452 = vld [vmem:[%s445 + $0x18] sm:$0xf]
  %v453 = vld [vmem:[%s445 + $0x1c] sm:$0xf]
  %v454 = vld [vmem:[%s445 + $0x20] sm:$0xf]
  %v455 = vld [vmem:[%s445 + $0x24] sm:$0xf]
  %v456 = vld [vmem:[%s445 + $0x28] sm:$0xf]
  %v457 = vld [vmem:[%s445 + $0x2c] sm:$0xf]
  %v458 = vld [vmem:[%s445 + $0x30] sm:$0xf]
  %v459 = vld [vmem:[%s445 + $0x34] sm:$0xf]
  %v460 = vld [vmem:[%s445 + $0x38] sm:$0xf]
  %v461 = vld [vmem:[%s445 + $0x3c] sm:$0xf]
  %v478 = vunpack.c.l.b16 %v446
  %v479 = vunpack.c.l.b16 %v447
  %v480 = vunpack.c.l.b16 %v448
  %v481 = vunpack.c.l.b16 %v449
  %v482 = vunpack.c.l.b16 %v450
  %v483 = vunpack.c.l.b16 %v451
  %v484 = vunpack.c.l.b16 %v452
  %v485 = vunpack.c.l.b16 %v453
  %v486 = vunpack.c.l.b16 %v454
  %v487 = vunpack.c.l.b16 %v455
  %v488 = vunpack.c.l.b16 %v456
  %v489 = vunpack.c.l.b16 %v457
  %v490 = vunpack.c.l.b16 %v458
  %v491 = vunpack.c.l.b16 %v459
  %v492 = vunpack.c.l.b16 %v460
  %v493 = vunpack.c.l.b16 %v461
  %v494 = vpack.c.b16 %v479, %v478
  %v495 = vpack.c.b16 %v481, %v480
  %v496 = vpack.c.b16 %v483, %v482
  %v497 = vpack.c.b16 %v485, %v484
  %v498 = vpack.c.b16 %v487, %v486
  %v499 = vpack.c.b16 %v489, %v488
  %v500 = vpack.c.b16 %v491, %v490
  %v501 = vpack.c.b16 %v493, %v492
  %510 = vmatpush.bf16.msra.mxu0 %v501
  %511 = vmatpush.bf16.msra.mxu0 %v500
  %512 = vmatpush.bf16.msra.mxu0 %v499
  %513 = vmatpush.bf16.msra.mxu0 %v498
  %514 = vmatpush.bf16.msra.mxu0 %v497
  %515 = vmatpush.bf16.msra.mxu0 %v496
  %516 = vmatpush.bf16.msra.mxu0 %v495
  %517 = vmatpush.bf16.msra.mxu0 %v494
  %518 = vmatmul.bf16.gmra.mxu0 %v444
  %v519 = vpop.f32.mrf.mxu0
  %v520 = vadd.f32 0.0, %v519
  %v521 = vpop.f32.mrf.mxu0
  %522 = vdwg.mxu0
  %v523 = vadd.f32 %v443, %v520
  %524 = vst [vmem:[%s7] sm:$0xff] %v523
  %v525 = vld [vmem:[#allocation3] sm:$0xff]
  %v526 = vpack.c.bf16 %v525, %v525
  %v527 = vld [vmem:[%s3] sm:$0xf]
  %v528 = vld [vmem:[%s3 + $0x4] sm:$0xf]
  %v529 = vld [vmem:[%s3 + $0x8] sm:$0xf]
  %v530 = vld [vmem:[%s3 + $0xc] sm:$0xf]
  %v531 = vld [vmem:[%s3 + $0x10] sm:$0xf]
  %v532 = vld [vmem:[%s3 + $0x14] sm:$0xf]
  %v533 = vld [vmem:[%s3 + $0x18] sm:$0xf]
  %v534 = vld [vmem:[%s3 + $0x1c] sm:$0xf]
  %v535 = vld [vmem:[%s3 + $0x20] sm:$0xf]
  %v536 = vld [vmem:[%s3 + $0x24] sm:$0xf]
  %v537 = vld [vmem:[%s3 + $0x28] sm:$0xf]
  %v538 = vld [vmem:[%s3 + $0x2c] sm:$0xf]
  %v539 = vld [vmem:[%s3 + $0x30] sm:$0xf]
  %v540 = vld [vmem:[%s3 + $0x34] sm:$0xf]
  %v541 = vld [vmem:[%s3 + $0x38] sm:$0xf]
  %v542 = vld [vmem:[%s3 + $0x3c] sm:$0xf]
  %v559 = vunpack.c.l.b16 %v527
  %v560 = vunpack.c.l.b16 %v528
  %v561 = vunpack.c.l.b16 %v529
  %v562 = vunpack.c.l.b16 %v530
  %v563 = vunpack.c.l.b16 %v531
  %v564 = vunpack.c.l.b16 %v532
  %v565 = vunpack.c.l.b16 %v533
  %v566 = vunpack.c.l.b16 %v534
  %v567 = vunpack.c.l.b16 %v535
  %v568 = vunpack.c.l.b16 %v536
  %v569 = vunpack.c.l.b16 %v537
  %v570 = vunpack.c.l.b16 %v538
  %v571 = vunpack.c.l.b16 %v539
  %v572 = vunpack.c.l.b16 %v540
  %v573 = vunpack.c.l.b16 %v541
  %v574 = vunpack.c.l.b16 %v542
  %v575 = vpack.c.b16 %v560, %v559
  %v576 = vpack.c.b16 %v562, %v561
  %v577 = vpack.c.b16 %v564, %v563
  %v578 = vpack.c.b16 %v566, %v565
  %v579 = vpack.c.b16 %v568, %v567
  %v580 = vpack.c.b16 %v570, %v569
  %v581 = vpack.c.b16 %v572, %v571
  %v582 = vpack.c.b16 %v574, %v573
  %591 = vmatpush.bf16.msra.mxu0 %v582
  %592 = vmatpush.bf16.msra.mxu0 %v581
  %593 = vmatpush.bf16.msra.mxu0 %v580
  %594 = vmatpush.bf16.msra.mxu0 %v579
  %595 = vmatpush.bf16.msra.mxu0 %v578
  %596 = vmatpush.bf16.msra.mxu0 %v577
  %597 = vmatpush.bf16.msra.mxu0 %v576
  %598 = vmatpush.bf16.msra.mxu0 %v575
  %599 = vmatmul.bf16.gmra.mxu0 %v526
  %v600 = vpop.f32.mrf.mxu0
  %v601 = vadd.f32 0.0, %v600
  %v602 = vpop.f32.mrf.mxu0
  %603 = vdwg.mxu0
  %s604 = scalar_lea.vmem %s0, 8
  %v605 = vld [vmem:[%s604] sm:$0xf]
  %v606 = vunpack.c.l.bf16 %v605
  %v607 = vld [vmem:[#allocation2] sm:$0xff]
  %v608 = vpack.c.bf16 %v607, %v607
  %v609 = vld [vmem:[%s1] sm:$0xf]
  %v610 = vld [vmem:[%s1 + $0x4] sm:$0xf]
  %v611 = vld [vmem:[%s1 + $0x8] sm:$0xf]
  %v612 = vld [vmem:[%s1 + $0xc] sm:$0xf]
  %v613 = vld [vmem:[%s1 + $0x10] sm:$0xf]
  %v614 = vld [vmem:[%s1 + $0x14] sm:$0xf]
  %v615 = vld [vmem:[%s1 + $0x18] sm:$0xf]
  %v616 = vld [vmem:[%s1 + $0x1c] sm:$0xf]
  %v617 = vld [vmem:[%s1 + $0x20] sm:$0xf]
  %v618 = vld [vmem:[%s1 + $0x24] sm:$0xf]
  %v619 = vld [vmem:[%s1 + $0x28] sm:$0xf]
  %v620 = vld [vmem:[%s1 + $0x2c] sm:$0xf]
  %v621 = vld [vmem:[%s1 + $0x30] sm:$0xf]
  %v622 = vld [vmem:[%s1 + $0x34] sm:$0xf]
  %v623 = vld [vmem:[%s1 + $0x38] sm:$0xf]
  %v624 = vld [vmem:[%s1 + $0x3c] sm:$0xf]
  %v641 = vunpack.c.l.b16 %v609
  %v642 = vunpack.c.l.b16 %v610
  %v643 = vunpack.c.l.b16 %v611
  %v644 = vunpack.c.l.b16 %v612
  %v645 = vunpack.c.l.b16 %v613
  %v646 = vunpack.c.l.b16 %v614
  %v647 = vunpack.c.l.b16 %v615
  %v648 = vunpack.c.l.b16 %v616
  %v649 = vunpack.c.l.b16 %v617
  %v650 = vunpack.c.l.b16 %v618
  %v651 = vunpack.c.l.b16 %v619
  %v652 = vunpack.c.l.b16 %v620
  %v653 = vunpack.c.l.b16 %v621
  %v654 = vunpack.c.l.b16 %v622
  %v655 = vunpack.c.l.b16 %v623
  %v656 = vunpack.c.l.b16 %v624
  %v657 = vpack.c.b16 %v642, %v641
  %v658 = vpack.c.b16 %v644, %v643
  %v659 = vpack.c.b16 %v646, %v645
  %v660 = vpack.c.b16 %v648, %v647
  %v661 = vpack.c.b16 %v650, %v649
  %v662 = vpack.c.b16 %v652, %v651
  %v663 = vpack.c.b16 %v654, %v653
  %v664 = vpack.c.b16 %v656, %v655
  %673 = vmatpush.bf16.msra.mxu0 %v664
  %674 = vmatpush.bf16.msra.mxu0 %v663
  %675 = vmatpush.bf16.msra.mxu0 %v662
  %676 = vmatpush.bf16.msra.mxu0 %v661
  %677 = vmatpush.bf16.msra.mxu0 %v660
  %678 = vmatpush.bf16.msra.mxu0 %v659
  %679 = vmatpush.bf16.msra.mxu0 %v658
  %680 = vmatpush.bf16.msra.mxu0 %v657
  %681 = vmatmul.bf16.gmra.mxu0 %v608
  %v682 = vpop.f32.mrf.mxu0
  %v683 = vadd.f32 0.0, %v682
  %v684 = vpop.f32.mrf.mxu0
  %685 = vdwg.mxu0
  %v686 = vadd.f32 %v606, %v683
  %v687 = vtanh.pop %v686
  %v688 = vpack.c.bf16 %v687, %v687
  %v689 = vld [vmem:[%s2] sm:$0xf]
  %v690 = vld [vmem:[%s2 + $0x4] sm:$0xf]
  %v691 = vld [vmem:[%s2 + $0x8] sm:$0xf]
  %v692 = vld [vmem:[%s2 + $0xc] sm:$0xf]
  %v693 = vld [vmem:[%s2 + $0x10] sm:$0xf]
  %v694 = vld [vmem:[%s2 + $0x14] sm:$0xf]
  %v695 = vld [vmem:[%s2 + $0x18] sm:$0xf]
  %v696 = vld [vmem:[%s2 + $0x1c] sm:$0xf]
  %v697 = vld [vmem:[%s2 + $0x20] sm:$0xf]
  %v698 = vld [vmem:[%s2 + $0x24] sm:$0xf]
  %v699 = vld [vmem:[%s2 + $0x28] sm:$0xf]
  %v700 = vld [vmem:[%s2 + $0x2c] sm:$0xf]
  %v701 = vld [vmem:[%s2 + $0x30] sm:$0xf]
  %v702 = vld [vmem:[%s2 + $0x34] sm:$0xf]
  %v703 = vld [vmem:[%s2 + $0x38] sm:$0xf]
  %v704 = vld [vmem:[%s2 + $0x3c] sm:$0xf]
  %v721 = vunpack.c.l.b16 %v689
  %v722 = vunpack.c.l.b16 %v690
  %v723 = vunpack.c.l.b16 %v691
  %v724 = vunpack.c.l.b16 %v692
  %v725 = vunpack.c.l.b16 %v693
  %v726 = vunpack.c.l.b16 %v694
  %v727 = vunpack.c.l.b16 %v695
  %v728 = vunpack.c.l.b16 %v696
  %v729 = vunpack.c.l.b16 %v697
  %v730 = vunpack.c.l.b16 %v698
  %v731 = vunpack.c.l.b16 %v699
  %v732 = vunpack.c.l.b16 %v700
  %v733 = vunpack.c.l.b16 %v701
  %v734 = vunpack.c.l.b16 %v702
  %v735 = vunpack.c.l.b16 %v703
  %v736 = vunpack.c.l.b16 %v704
  %v737 = vpack.c.b16 %v722, %v721
  %v738 = vpack.c.b16 %v724, %v723
  %v739 = vpack.c.b16 %v726, %v725
  %v740 = vpack.c.b16 %v728, %v727
  %v741 = vpack.c.b16 %v730, %v729
  %v742 = vpack.c.b16 %v732, %v731
  %v743 = vpack.c.b16 %v734, %v733
  %v744 = vpack.c.b16 %v736, %v735
  %753 = vmatpush.bf16.msra.mxu0 %v744
  %754 = vmatpush.bf16.msra.mxu0 %v743
  %755 = vmatpush.bf16.msra.mxu0 %v742
  %756 = vmatpush.bf16.msra.mxu0 %v741
  %757 = vmatpush.bf16.msra.mxu0 %v740
  %758 = vmatpush.bf16.msra.mxu0 %v739
  %759 = vmatpush.bf16.msra.mxu0 %v738
  %760 = vmatpush.bf16.msra.mxu0 %v737
  %761 = vmatmul.bf16.gmra.mxu0 %v688
  %v762 = vpop.f32.mrf.mxu0
  %v763 = vadd.f32 %v601, %v762
  %v764 = vpop.f32.mrf.mxu0
  %765 = vdwg.mxu0
  %v766 = vadd.f32 %v763, %v28
  %v767 = vtanh.pop %v766
  %768 = vst [vmem:[#allocation2] sm:$0xff] %v687
  %769 = vst [vmem:[#allocation3] sm:$0xff] %v767
  %v770 = vld [vmem:[%s7] sm:$0xff]
  %v771 = vpack.c.bf16 %v767, %v767
  %s772 = scalar_lea.vmem %s5, 128
  %v773 = vld [vmem:[%s772] sm:$0xf]
  %v774 = vld [vmem:[%s772 + $0x4] sm:$0xf]
  %v775 = vld [vmem:[%s772 + $0x8] sm:$0xf]
  %v776 = vld [vmem:[%s772 + $0xc] sm:$0xf]
  %v777 = vld [vmem:[%s772 + $0x10] sm:$0xf]
  %v778 = vld [vmem:[%s772 + $0x14] sm:$0xf]
  %v779 = vld [vmem:[%s772 + $0x18] sm:$0xf]
  %v780 = vld [vmem:[%s772 + $0x1c] sm:$0xf]
  %v781 = vld [vmem:[%s772 + $0x20] sm:$0xf]
  %v782 = vld [vmem:[%s772 + $0x24] sm:$0xf]
  %v783 = vld [vmem:[%s772 + $0x28] sm:$0xf]
  %v784 = vld [vmem:[%s772 + $0x2c] sm:$0xf]
  %v785 = vld [vmem:[%s772 + $0x30] sm:$0xf]
  %v786 = vld [vmem:[%s772 + $0x34] sm:$0xf]
  %v787 = vld [vmem:[%s772 + $0x38] sm:$0xf]
  %v788 = vld [vmem:[%s772 + $0x3c] sm:$0xf]
  %v805 = vunpack.c.l.b16 %v773
  %v806 = vunpack.c.l.b16 %v774
  %v807 = vunpack.c.l.b16 %v775
  %v808 = vunpack.c.l.b16 %v776
  %v809 = vunpack.c.l.b16 %v777
  %v810 = vunpack.c.l.b16 %v778
  %v811 = vunpack.c.l.b16 %v779
  %v812 = vunpack.c.l.b16 %v780
  %v813 = vunpack.c.l.b16 %v781
  %v814 = vunpack.c.l.b16 %v782
  %v815 = vunpack.c.l.b16 %v783
  %v816 = vunpack.c.l.b16 %v784
  %v817 = vunpack.c.l.b16 %v785
  %v818 = vunpack.c.l.b16 %v786
  %v819 = vunpack.c.l.b16 %v787
  %v820 = vunpack.c.l.b16 %v788
  %v821 = vpack.c.b16 %v806, %v805
  %v822 = vpack.c.b16 %v808, %v807
  %v823 = vpack.c.b16 %v810, %v809
  %v824 = vpack.c.b16 %v812, %v811
  %v825 = vpack.c.b16 %v814, %v813
  %v826 = vpack.c.b16 %v816, %v815
  %v827 = vpack.c.b16 %v818, %v817
  %v828 = vpack.c.b16 %v820, %v819
  %837 = vmatpush.bf16.msra.mxu0 %v828
  %838 = vmatpush.bf16.msra.mxu0 %v827
  %839 = vmatpush.bf16.msra.mxu0 %v826
  %840 = vmatpush.bf16.msra.mxu0 %v825
  %841 = vmatpush.bf16.msra.mxu0 %v824
  %842 = vmatpush.bf16.msra.mxu0 %v823
  %843 = vmatpush.bf16.msra.mxu0 %v822
  %844 = vmatpush.bf16.msra.mxu0 %v821
  %845 = vmatmul.bf16.gmra.mxu0 %v771
  %v846 = vpop.f32.mrf.mxu0
  %v847 = vadd.f32 0.0, %v846
  %v848 = vpop.f32.mrf.mxu0
  %849 = vdwg.mxu0
  %v850 = vadd.f32 %v770, %v847
  %851 = vst [vmem:[%s7] sm:$0xff] %v850
  %v852 = vld [vmem:[#allocation3] sm:$0xff]
  %v853 = vpack.c.bf16 %v852, %v852
  %v854 = vld [vmem:[%s3] sm:$0xf]
  %v855 = vld [vmem:[%s3 + $0x4] sm:$0xf]
  %v856 = vld [vmem:[%s3 + $0x8] sm:$0xf]
  %v857 = vld [vmem:[%s3 + $0xc] sm:$0xf]
  %v858 = vld [vmem:[%s3 + $0x10] sm:$0xf]
  %v859 = vld [vmem:[%s3 + $0x14] sm:$0xf]
  %v860 = vld [vmem:[%s3 + $0x18] sm:$0xf]
  %v861 = vld [vmem:[%s3 + $0x1c] sm:$0xf]
  %v862 = vld [vmem:[%s3 + $0x20] sm:$0xf]
  %v863 = vld [vmem:[%s3 + $0x24] sm:$0xf]
  %v864 = vld [vmem:[%s3 + $0x28] sm:$0xf]
  %v865 = vld [vmem:[%s3 + $0x2c] sm:$0xf]
  %v866 = vld [vmem:[%s3 + $0x30] sm:$0xf]
  %v867 = vld [vmem:[%s3 + $0x34] sm:$0xf]
  %v868 = vld [vmem:[%s3 + $0x38] sm:$0xf]
  %v869 = vld [vmem:[%s3 + $0x3c] sm:$0xf]
  %v886 = vunpack.c.l.b16 %v854
  %v887 = vunpack.c.l.b16 %v855
  %v888 = vunpack.c.l.b16 %v856
  %v889 = vunpack.c.l.b16 %v857
  %v890 = vunpack.c.l.b16 %v858
  %v891 = vunpack.c.l.b16 %v859
  %v892 = vunpack.c.l.b16 %v860
  %v893 = vunpack.c.l.b16 %v861
  %v894 = vunpack.c.l.b16 %v862
  %v895 = vunpack.c.l.b16 %v863
  %v896 = vunpack.c.l.b16 %v864
  %v897 = vunpack.c.l.b16 %v865
  %v898 = vunpack.c.l.b16 %v866
  %v899 = vunpack.c.l.b16 %v867
  %v900 = vunpack.c.l.b16 %v868
  %v901 = vunpack.c.l.b16 %v869
  %v902 = vpack.c.b16 %v887, %v886
  %v903 = vpack.c.b16 %v889, %v888
  %v904 = vpack.c.b16 %v891, %v890
  %v905 = vpack.c.b16 %v893, %v892
  %v906 = vpack.c.b16 %v895, %v894
  %v907 = vpack.c.b16 %v897, %v896
  %v908 = vpack.c.b16 %v899, %v898
  %v909 = vpack.c.b16 %v901, %v900
  %918 = vmatpush.bf16.msra.mxu0 %v909
  %919 = vmatpush.bf16.msra.mxu0 %v908
  %920 = vmatpush.bf16.msra.mxu0 %v907
  %921 = vmatpush.bf16.msra.mxu0 %v906
  %922 = vmatpush.bf16.msra.mxu0 %v905
  %923 = vmatpush.bf16.msra.mxu0 %v904
  %924 = vmatpush.bf16.msra.mxu0 %v903
  %925 = vmatpush.bf16.msra.mxu0 %v902
  %926 = vmatmul.bf16.gmra.mxu0 %v853
  %v927 = vpop.f32.mrf.mxu0
  %v928 = vadd.f32 0.0, %v927
  %v929 = vpop.f32.mrf.mxu0
  %930 = vdwg.mxu0
  %s931 = scalar_lea.vmem %s0, 12
  %v932 = vld [vmem:[%s931] sm:$0xf]
  %v933 = vunpack.c.l.bf16 %v932
  %v934 = vld [vmem:[#allocation2] sm:$0xff]
  %v935 = vpack.c.bf16 %v934, %v934
  %v936 = vld [vmem:[%s1] sm:$0xf]
  %v937 = vld [vmem:[%s1 + $0x4] sm:$0xf]
  %v938 = vld [vmem:[%s1 + $0x8] sm:$0xf]
  %v939 = vld [vmem:[%s1 + $0xc] sm:$0xf]
  %v940 = vld [vmem:[%s1 + $0x10] sm:$0xf]
  %v941 = vld [vmem:[%s1 + $0x14] sm:$0xf]
  %v942 = vld [vmem:[%s1 + $0x18] sm:$0xf]
  %v943 = vld [vmem:[%s1 + $0x1c] sm:$0xf]
  %v944 = vld [vmem:[%s1 + $0x20] sm:$0xf]
  %v945 = vld [vmem:[%s1 + $0x24] sm:$0xf]
  %v946 = vld [vmem:[%s1 + $0x28] sm:$0xf]
  %v947 = vld [vmem:[%s1 + $0x2c] sm:$0xf]
  %v948 = vld [vmem:[%s1 + $0x30] sm:$0xf]
  %v949 = vld [vmem:[%s1 + $0x34] sm:$0xf]
  %v950 = vld [vmem:[%s1 + $0x38] sm:$0xf]
  %v951 = vld [vmem:[%s1 + $0x3c] sm:$0xf]
  %v968 = vunpack.c.l.b16 %v936
  %v969 = vunpack.c.l.b16 %v937
  %v970 = vunpack.c.l.b16 %v938
  %v971 = vunpack.c.l.b16 %v939
  %v972 = vunpack.c.l.b16 %v940
  %v973 = vunpack.c.l.b16 %v941
  %v974 = vunpack.c.l.b16 %v942
  %v975 = vunpack.c.l.b16 %v943
  %v976 = vunpack.c.l.b16 %v944
  %v977 = vunpack.c.l.b16 %v945
  %v978 = vunpack.c.l.b16 %v946
  %v979 = vunpack.c.l.b16 %v947
  %v980 = vunpack.c.l.b16 %v948
  %v981 = vunpack.c.l.b16 %v949
  %v982 = vunpack.c.l.b16 %v950
  %v983 = vunpack.c.l.b16 %v951
  %v984 = vpack.c.b16 %v969, %v968
  %v985 = vpack.c.b16 %v971, %v970
  %v986 = vpack.c.b16 %v973, %v972
  %v987 = vpack.c.b16 %v975, %v974
  %v988 = vpack.c.b16 %v977, %v976
  %v989 = vpack.c.b16 %v979, %v978
  %v990 = vpack.c.b16 %v981, %v980
  %v991 = vpack.c.b16 %v983, %v982
  %1000 = vmatpush.bf16.msra.mxu0 %v991
  %1001 = vmatpush.bf16.msra.mxu0 %v990
  %1002 = vmatpush.bf16.msra.mxu0 %v989
  %1003 = vmatpush.bf16.msra.mxu0 %v988
  %1004 = vmatpush.bf16.msra.mxu0 %v987
  %1005 = vmatpush.bf16.msra.mxu0 %v986
  %1006 = vmatpush.bf16.msra.mxu0 %v985
  %1007 = vmatpush.bf16.msra.mxu0 %v984
  %1008 = vmatmul.bf16.gmra.mxu0 %v935
  %v1009 = vpop.f32.mrf.mxu0
  %v1010 = vadd.f32 0.0, %v1009
  %v1011 = vpop.f32.mrf.mxu0
  %1012 = vdwg.mxu0
  %v1013 = vadd.f32 %v933, %v1010
  %v1014 = vtanh.pop %v1013
  %v1015 = vpack.c.bf16 %v1014, %v1014
  %v1016 = vld [vmem:[%s2] sm:$0xf]
  %v1017 = vld [vmem:[%s2 + $0x4] sm:$0xf]
  %v1018 = vld [vmem:[%s2 + $0x8] sm:$0xf]
  %v1019 = vld [vmem:[%s2 + $0xc] sm:$0xf]
  %v1020 = vld [vmem:[%s2 + $0x10] sm:$0xf]
  %v1021 = vld [vmem:[%s2 + $0x14] sm:$0xf]
  %v1022 = vld [vmem:[%s2 + $0x18] sm:$0xf]
  %v1023 = vld [vmem:[%s2 + $0x1c] sm:$0xf]
  %v1024 = vld [vmem:[%s2 + $0x20] sm:$0xf]
  %v1025 = vld [vmem:[%s2 + $0x24] sm:$0xf]
  %v1026 = vld [vmem:[%s2 + $0x28] sm:$0xf]
  %v1027 = vld [vmem:[%s2 + $0x2c] sm:$0xf]
  %v1028 = vld [vmem:[%s2 + $0x30] sm:$0xf]
  %v1029 = vld [vmem:[%s2 + $0x34] sm:$0xf]
  %v1030 = vld [vmem:[%s2 + $0x38] sm:$0xf]
  %v1031 = vld [vmem:[%s2 + $0x3c] sm:$0xf]
  %v1048 = vunpack.c.l.b16 %v1016
  %v1049 = vunpack.c.l.b16 %v1017
  %v1050 = vunpack.c.l.b16 %v1018
  %v1051 = vunpack.c.l.b16 %v1019
  %v1052 = vunpack.c.l.b16 %v1020
  %v1053 = vunpack.c.l.b16 %v1021
  %v1054 = vunpack.c.l.b16 %v1022
  %v1055 = vunpack.c.l.b16 %v1023
  %v1056 = vunpack.c.l.b16 %v1024
  %v1057 = vunpack.c.l.b16 %v1025
  %v1058 = vunpack.c.l.b16 %v1026
  %v1059 = vunpack.c.l.b16 %v1027
  %v1060 = vunpack.c.l.b16 %v1028
  %v1061 = vunpack.c.l.b16 %v1029
  %v1062 = vunpack.c.l.b16 %v1030
  %v1063 = vunpack.c.l.b16 %v1031
  %v1064 = vpack.c.b16 %v1049, %v1048
  %v1065 = vpack.c.b16 %v1051, %v1050
  %v1066 = vpack.c.b16 %v1053, %v1052
  %v1067 = vpack.c.b16 %v1055, %v1054
  %v1068 = vpack.c.b16 %v1057, %v1056
  %v1069 = vpack.c.b16 %v1059, %v1058
  %v1070 = vpack.c.b16 %v1061, %v1060
  %v1071 = vpack.c.b16 %v1063, %v1062
  %1080 = vmatpush.bf16.msra.mxu0 %v1071
  %1081 = vmatpush.bf16.msra.mxu0 %v1070
  %1082 = vmatpush.bf16.msra.mxu0 %v1069
  %1083 = vmatpush.bf16.msra.mxu0 %v1068
  %1084 = vmatpush.bf16.msra.mxu0 %v1067
  %1085 = vmatpush.bf16.msra.mxu0 %v1066
  %1086 = vmatpush.bf16.msra.mxu0 %v1065
  %1087 = vmatpush.bf16.msra.mxu0 %v1064
  %1088 = vmatmul.bf16.gmra.mxu0 %v1015
  %v1089 = vpop.f32.mrf.mxu0
  %v1090 = vadd.f32 %v928, %v1089
  %v1091 = vpop.f32.mrf.mxu0
  %1092 = vdwg.mxu0
  %v1093 = vadd.f32 %v1090, %v28
  %v1094 = vtanh.pop %v1093
  %1095 = vst [vmem:[#allocation2] sm:$0xff] %v1014
  %1096 = vst [vmem:[#allocation3] sm:$0xff] %v1094
  %v1097 = vld [vmem:[%s7] sm:$0xff]
  %v1098 = vpack.c.bf16 %v1094, %v1094
  %s1099 = scalar_lea.vmem %s5, 192
  %v1100 = vld [vmem:[%s1099] sm:$0xf]
  %v1101 = vld [vmem:[%s1099 + $0x4] sm:$0xf]
  %v1102 = vld [vmem:[%s1099 + $0x8] sm:$0xf]
  %v1103 = vld [vmem:[%s1099 + $0xc] sm:$0xf]
  %v1104 = vld [vmem:[%s1099 + $0x10] sm:$0xf]
  %v1105 = vld [vmem:[%s1099 + $0x14] sm:$0xf]
  %v1106 = vld [vmem:[%s1099 + $0x18] sm:$0xf]
  %v1107 = vld [vmem:[%s1099 + $0x1c] sm:$0xf]
  %v1108 = vld [vmem:[%s1099 + $0x20] sm:$0xf]
  %v1109 = vld [vmem:[%s1099 + $0x24] sm:$0xf]
  %v1110 = vld [vmem:[%s1099 + $0x28] sm:$0xf]
  %v1111 = vld [vmem:[%s1099 + $0x2c] sm:$0xf]
  %v1112 = vld [vmem:[%s1099 + $0x30] sm:$0xf]
  %v1113 = vld [vmem:[%s1099 + $0x34] sm:$0xf]
  %v1114 = vld [vmem:[%s1099 + $0x38] sm:$0xf]
  %v1115 = vld [vmem:[%s1099 + $0x3c] sm:$0xf]
  %v1132 = vunpack.c.l.b16 %v1100
  %v1133 = vunpack.c.l.b16 %v1101
  %v1134 = vunpack.c.l.b16 %v1102
  %v1135 = vunpack.c.l.b16 %v1103
  %v1136 = vunpack.c.l.b16 %v1104
  %v1137 = vunpack.c.l.b16 %v1105
  %v1138 = vunpack.c.l.b16 %v1106
  %v1139 = vunpack.c.l.b16 %v1107
  %v1140 = vunpack.c.l.b16 %v1108
  %v1141 = vunpack.c.l.b16 %v1109
  %v1142 = vunpack.c.l.b16 %v1110
  %v1143 = vunpack.c.l.b16 %v1111
  %v1144 = vunpack.c.l.b16 %v1112
  %v1145 = vunpack.c.l.b16 %v1113
  %v1146 = vunpack.c.l.b16 %v1114
  %v1147 = vunpack.c.l.b16 %v1115
  %v1148 = vpack.c.b16 %v1133, %v1132
  %v1149 = vpack.c.b16 %v1135, %v1134
  %v1150 = vpack.c.b16 %v1137, %v1136
  %v1151 = vpack.c.b16 %v1139, %v1138
  %v1152 = vpack.c.b16 %v1141, %v1140
  %v1153 = vpack.c.b16 %v1143, %v1142
  %v1154 = vpack.c.b16 %v1145, %v1144
  %v1155 = vpack.c.b16 %v1147, %v1146
  %1164 = vmatpush.bf16.msra.mxu0 %v1155
  %1165 = vmatpush.bf16.msra.mxu0 %v1154
  %1166 = vmatpush.bf16.msra.mxu0 %v1153
  %1167 = vmatpush.bf16.msra.mxu0 %v1152
  %1168 = vmatpush.bf16.msra.mxu0 %v1151
  %1169 = vmatpush.bf16.msra.mxu0 %v1150
  %1170 = vmatpush.bf16.msra.mxu0 %v1149
  %1171 = vmatpush.bf16.msra.mxu0 %v1148
  %1172 = vmatmul.bf16.gmra.mxu0 %v1098
  %v1173 = vpop.f32.mrf.mxu0
  %v1174 = vadd.f32 0.0, %v1173
  %v1175 = vpop.f32.mrf.mxu0
  %1176 = vdwg.mxu0
  %v1177 = vadd.f32 %v1097, %v1174
  %1178 = vst [vmem:[%s7] sm:$0xff] %v1177
  %v1179 = vld [vmem:[#allocation3] sm:$0xff]
  %v1180 = vpack.c.bf16 %v1179, %v1179
  %v1181 = vld [vmem:[%s3] sm:$0xf]
  %v1182 = vld [vmem:[%s3 + $0x4] sm:$0xf]
  %v1183 = vld [vmem:[%s3 + $0x8] sm:$0xf]
  %v1184 = vld [vmem:[%s3 + $0xc] sm:$0xf]
  %v1185 = vld [vmem:[%s3 + $0x10] sm:$0xf]
  %v1186 = vld [vmem:[%s3 + $0x14] sm:$0xf]
  %v1187 = vld [vmem:[%s3 + $0x18] sm:$0xf]
  %v1188 = vld [vmem:[%s3 + $0x1c] sm:$0xf]
  %v1189 = vld [vmem:[%s3 + $0x20] sm:$0xf]
  %v1190 = vld [vmem:[%s3 + $0x24] sm:$0xf]
  %v1191 = vld [vmem:[%s3 + $0x28] sm:$0xf]
  %v1192 = vld [vmem:[%s3 + $0x2c] sm:$0xf]
  %v1193 = vld [vmem:[%s3 + $0x30] sm:$0xf]
  %v1194 = vld [vmem:[%s3 + $0x34] sm:$0xf]
  %v1195 = vld [vmem:[%s3 + $0x38] sm:$0xf]
  %v1196 = vld [vmem:[%s3 + $0x3c] sm:$0xf]
  %v1213 = vunpack.c.l.b16 %v1181
  %v1214 = vunpack.c.l.b16 %v1182
  %v1215 = vunpack.c.l.b16 %v1183
  %v1216 = vunpack.c.l.b16 %v1184
  %v1217 = vunpack.c.l.b16 %v1185
  %v1218 = vunpack.c.l.b16 %v1186
  %v1219 = vunpack.c.l.b16 %v1187
  %v1220 = vunpack.c.l.b16 %v1188
  %v1221 = vunpack.c.l.b16 %v1189
  %v1222 = vunpack.c.l.b16 %v1190
  %v1223 = vunpack.c.l.b16 %v1191
  %v1224 = vunpack.c.l.b16 %v1192
  %v1225 = vunpack.c.l.b16 %v1193
  %v1226 = vunpack.c.l.b16 %v1194
  %v1227 = vunpack.c.l.b16 %v1195
  %v1228 = vunpack.c.l.b16 %v1196
  %v1229 = vpack.c.b16 %v1214, %v1213
  %v1230 = vpack.c.b16 %v1216, %v1215
  %v1231 = vpack.c.b16 %v1218, %v1217
  %v1232 = vpack.c.b16 %v1220, %v1219
  %v1233 = vpack.c.b16 %v1222, %v1221
  %v1234 = vpack.c.b16 %v1224, %v1223
  %v1235 = vpack.c.b16 %v1226, %v1225
  %v1236 = vpack.c.b16 %v1228, %v1227
  %1245 = vmatpush.bf16.msra.mxu0 %v1236
  %1246 = vmatpush.bf16.msra.mxu0 %v1235
  %1247 = vmatpush.bf16.msra.mxu0 %v1234
  %1248 = vmatpush.bf16.msra.mxu0 %v1233
  %1249 = vmatpush.bf16.msra.mxu0 %v1232
  %1250 = vmatpush.bf16.msra.mxu0 %v1231
  %1251 = vmatpush.bf16.msra.mxu0 %v1230
  %1252 = vmatpush.bf16.msra.mxu0 %v1229
  %1253 = vmatmul.bf16.gmra.mxu0 %v1180
  %v1254 = vpop.f32.mrf.mxu0
  %v1255 = vadd.f32 0.0, %v1254
  %v1256 = vpop.f32.mrf.mxu0
  %1257 = vdwg.mxu0
  %s1258 = scalar_lea.vmem %s0, 16
  %v1259 = vld [vmem:[%s1258] sm:$0xf]
  %v1260 = vunpack.c.l.bf16 %v1259
  %v1261 = vld [vmem:[#allocation2] sm:$0xff]
  %v1262 = vpack.c.bf16 %v1261, %v1261
  %v1263 = vld [vmem:[%s1] sm:$0xf]
  %v1264 = vld [vmem:[%s1 + $0x4] sm:$0xf]
  %v1265 = vld [vmem:[%s1 + $0x8] sm:$0xf]
  %v1266 = vld [vmem:[%s1 + $0xc] sm:$0xf]
  %v1267 = vld [vmem:[%s1 + $0x10] sm:$0xf]
  %v1268 = vld [vmem:[%s1 + $0x14] sm:$0xf]
  %v1269 = vld [vmem:[%s1 + $0x18] sm:$0xf]
  %v1270 = vld [vmem:[%s1 + $0x1c] sm:$0xf]
  %v1271 = vld [vmem:[%s1 + $0x20] sm:$0xf]
  %v1272 = vld [vmem:[%s1 + $0x24] sm:$0xf]
  %v1273 = vld [vmem:[%s1 + $0x28] sm:$0xf]
  %v1274 = vld [vmem:[%s1 + $0x2c] sm:$0xf]
  %v1275 = vld [vmem:[%s1 + $0x30] sm:$0xf]
  %v1276 = vld [vmem:[%s1 + $0x34] sm:$0xf]
  %v1277 = vld [vmem:[%s1 + $0x38] sm:$0xf]
  %v1278 = vld [vmem:[%s1 + $0x3c] sm:$0xf]
  %v1295 = vunpack.c.l.b16 %v1263
  %v1296 = vunpack.c.l.b16 %v1264
  %v1297 = vunpack.c.l.b16 %v1265
  %v1298 = vunpack.c.l.b16 %v1266
  %v1299 = vunpack.c.l.b16 %v1267
  %v1300 = vunpack.c.l.b16 %v1268
  %v1301 = vunpack.c.l.b16 %v1269
  %v1302 = vunpack.c.l.b16 %v1270
  %v1303 = vunpack.c.l.b16 %v1271
  %v1304 = vunpack.c.l.b16 %v1272
  %v1305 = vunpack.c.l.b16 %v1273
  %v1306 = vunpack.c.l.b16 %v1274
  %v1307 = vunpack.c.l.b16 %v1275
  %v1308 = vunpack.c.l.b16 %v1276
  %v1309 = vunpack.c.l.b16 %v1277
  %v1310 = vunpack.c.l.b16 %v1278
  %v1311 = vpack.c.b16 %v1296, %v1295
  %v1312 = vpack.c.b16 %v1298, %v1297
  %v1313 = vpack.c.b16 %v1300, %v1299
  %v1314 = vpack.c.b16 %v1302, %v1301
  %v1315 = vpack.c.b16 %v1304, %v1303
  %v1316 = vpack.c.b16 %v1306, %v1305
  %v1317 = vpack.c.b16 %v1308, %v1307
  %v1318 = vpack.c.b16 %v1310, %v1309
  %1327 = vmatpush.bf16.msra.mxu0 %v1318
  %1328 = vmatpush.bf16.msra.mxu0 %v1317
  %1329 = vmatpush.bf16.msra.mxu0 %v1316
  %1330 = vmatpush.bf16.msra.mxu0 %v1315
  %1331 = vmatpush.bf16.msra.mxu0 %v1314
  %1332 = vmatpush.bf16.msra.mxu0 %v1313
  %1333 = vmatpush.bf16.msra.mxu0 %v1312
  %1334 = vmatpush.bf16.msra.mxu0 %v1311
  %1335 = vmatmul.bf16.gmra.mxu0 %v1262
  %v1336 = vpop.f32.mrf.mxu0
  %v1337 = vadd.f32 0.0, %v1336
  %v1338 = vpop.f32.mrf.mxu0
  %1339 = vdwg.mxu0
  %v1340 = vadd.f32 %v1260, %v1337
  %v1341 = vtanh.pop %v1340
  %v1342 = vpack.c.bf16 %v1341, %v1341
  %v1343 = vld [vmem:[%s2] sm:$0xf]
  %v1344 = vld [vmem:[%s2 + $0x4] sm:$0xf]
  %v1345 = vld [vmem:[%s2 + $0x8] sm:$0xf]
  %v1346 = vld [vmem:[%s2 + $0xc] sm:$0xf]
  %v1347 = vld [vmem:[%s2 + $0x10] sm:$0xf]
  %v1348 = vld [vmem:[%s2 + $0x14] sm:$0xf]
  %v1349 = vld [vmem:[%s2 + $0x18] sm:$0xf]
  %v1350 = vld [vmem:[%s2 + $0x1c] sm:$0xf]
  %v1351 = vld [vmem:[%s2 + $0x20] sm:$0xf]
  %v1352 = vld [vmem:[%s2 + $0x24] sm:$0xf]
  %v1353 = vld [vmem:[%s2 + $0x28] sm:$0xf]
  %v1354 = vld [vmem:[%s2 + $0x2c] sm:$0xf]
  %v1355 = vld [vmem:[%s2 + $0x30] sm:$0xf]
  %v1356 = vld [vmem:[%s2 + $0x34] sm:$0xf]
  %v1357 = vld [vmem:[%s2 + $0x38] sm:$0xf]
  %v1358 = vld [vmem:[%s2 + $0x3c] sm:$0xf]
  %v1375 = vunpack.c.l.b16 %v1343
  %v1376 = vunpack.c.l.b16 %v1344
  %v1377 = vunpack.c.l.b16 %v1345
  %v1378 = vunpack.c.l.b16 %v1346
  %v1379 = vunpack.c.l.b16 %v1347
  %v1380 = vunpack.c.l.b16 %v1348
  %v1381 = vunpack.c.l.b16 %v1349
  %v1382 = vunpack.c.l.b16 %v1350
  %v1383 = vunpack.c.l.b16 %v1351
  %v1384 = vunpack.c.l.b16 %v1352
  %v1385 = vunpack.c.l.b16 %v1353
  %v1386 = vunpack.c.l.b16 %v1354
  %v1387 = vunpack.c.l.b16 %v1355
  %v1388 = vunpack.c.l.b16 %v1356
  %v1389 = vunpack.c.l.b16 %v1357
  %v1390 = vunpack.c.l.b16 %v1358
  %v1391 = vpack.c.b16 %v1376, %v1375
  %v1392 = vpack.c.b16 %v1378, %v1377
  %v1393 = vpack.c.b16 %v1380, %v1379
  %v1394 = vpack.c.b16 %v1382, %v1381
  %v1395 = vpack.c.b16 %v1384, %v1383
  %v1396 = vpack.c.b16 %v1386, %v1385
  %v1397 = vpack.c.b16 %v1388, %v1387
  %v1398 = vpack.c.b16 %v1390, %v1389
  %1407 = vmatpush.bf16.msra.mxu0 %v1398
  %1408 = vmatpush.bf16.msra.mxu0 %v1397
  %1409 = vmatpush.bf16.msra.mxu0 %v1396
  %1410 = vmatpush.bf16.msra.mxu0 %v1395
  %1411 = vmatpush.bf16.msra.mxu0 %v1394
  %1412 = vmatpush.bf16.msra.mxu0 %v1393
  %1413 = vmatpush.bf16.msra.mxu0 %v1392
  %1414 = vmatpush.bf16.msra.mxu0 %v1391
  %1415 = vmatmul.bf16.gmra.mxu0 %v1342
  %v1416 = vpop.f32.mrf.mxu0
  %v1417 = vadd.f32 %v1255, %v1416
  %v1418 = vpop.f32.mrf.mxu0
  %1419 = vdwg.mxu0
  %v1420 = vadd.f32 %v1417, %v28
  %v1421 = vtanh.pop %v1420
  %1422 = vst [vmem:[#allocation2] sm:$0xff] %v1341
  %1423 = vst [vmem:[#allocation3] sm:$0xff] %v1421
  %v1424 = vld [vmem:[%s7] sm:$0xff]
  %v1425 = vpack.c.bf16 %v1421, %v1421
  %s1426 = scalar_lea.vmem %s5, 256
  %v1427 = vld [vmem:[%s1426] sm:$0xf]
  %v1428 = vld [vmem:[%s1426 + $0x4] sm:$0xf]
  %v1429 = vld [vmem:[%s1426 + $0x8] sm:$0xf]
  %v1430 = vld [vmem:[%s1426 + $0xc] sm:$0xf]
  %v1431 = vld [vmem:[%s1426 + $0x10] sm:$0xf]
  %v1432 = vld [vmem:[%s1426 + $0x14] sm:$0xf]
  %v1433 = vld [vmem:[%s1426 + $0x18] sm:$0xf]
  %v1434 = vld [vmem:[%s1426 + $0x1c] sm:$0xf]
  %v1435 = vld [vmem:[%s1426 + $0x20] sm:$0xf]
  %v1436 = vld [vmem:[%s1426 + $0x24] sm:$0xf]
  %v1437 = vld [vmem:[%s1426 + $0x28] sm:$0xf]
  %v1438 = vld [vmem:[%s1426 + $0x2c] sm:$0xf]
  %v1439 = vld [vmem:[%s1426 + $0x30] sm:$0xf]
  %v1440 = vld [vmem:[%s1426 + $0x34] sm:$0xf]
  %v1441 = vld [vmem:[%s1426 + $0x38] sm:$0xf]
  %v1442 = vld [vmem:[%s1426 + $0x3c] sm:$0xf]
  %v1459 = vunpack.c.l.b16 %v1427
  %v1460 = vunpack.c.l.b16 %v1428
  %v1461 = vunpack.c.l.b16 %v1429
  %v1462 = vunpack.c.l.b16 %v1430
  %v1463 = vunpack.c.l.b16 %v1431
  %v1464 = vunpack.c.l.b16 %v1432
  %v1465 = vunpack.c.l.b16 %v1433
  %v1466 = vunpack.c.l.b16 %v1434
  %v1467 = vunpack.c.l.b16 %v1435
  %v1468 = vunpack.c.l.b16 %v1436
  %v1469 = vunpack.c.l.b16 %v1437
  %v1470 = vunpack.c.l.b16 %v1438
  %v1471 = vunpack.c.l.b16 %v1439
  %v1472 = vunpack.c.l.b16 %v1440
  %v1473 = vunpack.c.l.b16 %v1441
  %v1474 = vunpack.c.l.b16 %v1442
  %v1475 = vpack.c.b16 %v1460, %v1459
  %v1476 = vpack.c.b16 %v1462, %v1461
  %v1477 = vpack.c.b16 %v1464, %v1463
  %v1478 = vpack.c.b16 %v1466, %v1465
  %v1479 = vpack.c.b16 %v1468, %v1467
  %v1480 = vpack.c.b16 %v1470, %v1469
  %v1481 = vpack.c.b16 %v1472, %v1471
  %v1482 = vpack.c.b16 %v1474, %v1473
  %1491 = vmatpush.bf16.msra.mxu0 %v1482
  %1492 = vmatpush.bf16.msra.mxu0 %v1481
  %1493 = vmatpush.bf16.msra.mxu0 %v1480
  %1494 = vmatpush.bf16.msra.mxu0 %v1479
  %1495 = vmatpush.bf16.msra.mxu0 %v1478
  %1496 = vmatpush.bf16.msra.mxu0 %v1477
  %1497 = vmatpush.bf16.msra.mxu0 %v1476
  %1498 = vmatpush.bf16.msra.mxu0 %v1475
  %1499 = vmatmul.bf16.gmra.mxu0 %v1425
  %v1500 = vpop.f32.mrf.mxu0
  %v1501 = vadd.f32 0.0, %v1500
  %v1502 = vpop.f32.mrf.mxu0
  %1503 = vdwg.mxu0
  %v1504 = vadd.f32 %v1424, %v1501
  %1505 = vst [vmem:[%s7] sm:$0xff] %v1504
  %v1506 = vld [vmem:[#allocation3] sm:$0xff]
  %v1507 = vpack.c.bf16 %v1506, %v1506
  %v1508 = vld [vmem:[%s3] sm:$0xf]
  %v1509 = vld [vmem:[%s3 + $0x4] sm:$0xf]
  %v1510 = vld [vmem:[%s3 + $0x8] sm:$0xf]
  %v1511 = vld [vmem:[%s3 + $0xc] sm:$0xf]
  %v1512 = vld [vmem:[%s3 + $0x10] sm:$0xf]
  %v1513 = vld [vmem:[%s3 + $0x14] sm:$0xf]
  %v1514 = vld [vmem:[%s3 + $0x18] sm:$0xf]
  %v1515 = vld [vmem:[%s3 + $0x1c] sm:$0xf]
  %v1516 = vld [vmem:[%s3 + $0x20] sm:$0xf]
  %v1517 = vld [vmem:[%s3 + $0x24] sm:$0xf]
  %v1518 = vld [vmem:[%s3 + $0x28] sm:$0xf]
  %v1519 = vld [vmem:[%s3 + $0x2c] sm:$0xf]
  %v1520 = vld [vmem:[%s3 + $0x30] sm:$0xf]
  %v1521 = vld [vmem:[%s3 + $0x34] sm:$0xf]
  %v1522 = vld [vmem:[%s3 + $0x38] sm:$0xf]
  %v1523 = vld [vmem:[%s3 + $0x3c] sm:$0xf]
  %v1540 = vunpack.c.l.b16 %v1508
  %v1541 = vunpack.c.l.b16 %v1509
  %v1542 = vunpack.c.l.b16 %v1510
  %v1543 = vunpack.c.l.b16 %v1511
  %v1544 = vunpack.c.l.b16 %v1512
  %v1545 = vunpack.c.l.b16 %v1513
  %v1546 = vunpack.c.l.b16 %v1514
  %v1547 = vunpack.c.l.b16 %v1515
  %v1548 = vunpack.c.l.b16 %v1516
  %v1549 = vunpack.c.l.b16 %v1517
  %v1550 = vunpack.c.l.b16 %v1518
  %v1551 = vunpack.c.l.b16 %v1519
  %v1552 = vunpack.c.l.b16 %v1520
  %v1553 = vunpack.c.l.b16 %v1521
  %v1554 = vunpack.c.l.b16 %v1522
  %v1555 = vunpack.c.l.b16 %v1523
  %v1556 = vpack.c.b16 %v1541, %v1540
  %v1557 = vpack.c.b16 %v1543, %v1542
  %v1558 = vpack.c.b16 %v1545, %v1544
  %v1559 = vpack.c.b16 %v1547, %v1546
  %v1560 = vpack.c.b16 %v1549, %v1548
  %v1561 = vpack.c.b16 %v1551, %v1550
  %v1562 = vpack.c.b16 %v1553, %v1552
  %v1563 = vpack.c.b16 %v1555, %v1554
  %1572 = vmatpush.bf16.msra.mxu0 %v1563
  %1573 = vmatpush.bf16.msra.mxu0 %v1562
  %1574 = vmatpush.bf16.msra.mxu0 %v1561
  %1575 = vmatpush.bf16.msra.mxu0 %v1560
  %1576 = vmatpush.bf16.msra.mxu0 %v1559
  %1577 = vmatpush.bf16.msra.mxu0 %v1558
  %1578 = vmatpush.bf16.msra.mxu0 %v1557
  %1579 = vmatpush.bf16.msra.mxu0 %v1556
  %1580 = vmatmul.bf16.gmra.mxu0 %v1507
  %v1581 = vpop.f32.mrf.mxu0
  %v1582 = vadd.f32 0.0, %v1581
  %v1583 = vpop.f32.mrf.mxu0
  %1584 = vdwg.mxu0
  %s1585 = scalar_lea.vmem %s0, 20
  %v1586 = vld [vmem:[%s1585] sm:$0xf]
  %v1587 = vunpack.c.l.bf16 %v1586
  %v1588 = vld [vmem:[#allocation2] sm:$0xff]
  %v1589 = vpack.c.bf16 %v1588, %v1588
  %v1590 = vld [vmem:[%s1] sm:$0xf]
  %v1591 = vld [vmem:[%s1 + $0x4] sm:$0xf]
  %v1592 = vld [vmem:[%s1 + $0x8] sm:$0xf]
  %v1593 = vld [vmem:[%s1 + $0xc] sm:$0xf]
  %v1594 = vld [vmem:[%s1 + $0x10] sm:$0xf]
  %v1595 = vld [vmem:[%s1 + $0x14] sm:$0xf]
  %v1596 = vld [vmem:[%s1 + $0x18] sm:$0xf]
  %v1597 = vld [vmem:[%s1 + $0x1c] sm:$0xf]
  %v1598 = vld [vmem:[%s1 + $0x20] sm:$0xf]
  %v1599 = vld [vmem:[%s1 + $0x24] sm:$0xf]
  %v1600 = vld [vmem:[%s1 + $0x28] sm:$0xf]
  %v1601 = vld [vmem:[%s1 + $0x2c] sm:$0xf]
  %v1602 = vld [vmem:[%s1 + $0x30] sm:$0xf]
  %v1603 = vld [vmem:[%s1 + $0x34] sm:$0xf]
  %v1604 = vld [vmem:[%s1 + $0x38] sm:$0xf]
  %v1605 = vld [vmem:[%s1 + $0x3c] sm:$0xf]
  %v1622 = vunpack.c.l.b16 %v1590
  %v1623 = vunpack.c.l.b16 %v1591
  %v1624 = vunpack.c.l.b16 %v1592
  %v1625 = vunpack.c.l.b16 %v1593
  %v1626 = vunpack.c.l.b16 %v1594
  %v1627 = vunpack.c.l.b16 %v1595
  %v1628 = vunpack.c.l.b16 %v1596
  %v1629 = vunpack.c.l.b16 %v1597
  %v1630 = vunpack.c.l.b16 %v1598
  %v1631 = vunpack.c.l.b16 %v1599
  %v1632 = vunpack.c.l.b16 %v1600
  %v1633 = vunpack.c.l.b16 %v1601
  %v1634 = vunpack.c.l.b16 %v1602
  %v1635 = vunpack.c.l.b16 %v1603
  %v1636 = vunpack.c.l.b16 %v1604
  %v1637 = vunpack.c.l.b16 %v1605
  %v1638 = vpack.c.b16 %v1623, %v1622
  %v1639 = vpack.c.b16 %v1625, %v1624
  %v1640 = vpack.c.b16 %v1627, %v1626
  %v1641 = vpack.c.b16 %v1629, %v1628
  %v1642 = vpack.c.b16 %v1631, %v1630
  %v1643 = vpack.c.b16 %v1633, %v1632
  %v1644 = vpack.c.b16 %v1635, %v1634
  %v1645 = vpack.c.b16 %v1637, %v1636
  %1654 = vmatpush.bf16.msra.mxu0 %v1645
  %1655 = vmatpush.bf16.msra.mxu0 %v1644
  %1656 = vmatpush.bf16.msra.mxu0 %v1643
  %1657 = vmatpush.bf16.msra.mxu0 %v1642
  %1658 = vmatpush.bf16.msra.mxu0 %v1641
  %1659 = vmatpush.bf16.msra.mxu0 %v1640
  %1660 = vmatpush.bf16.msra.mxu0 %v1639
  %1661 = vmatpush.bf16.msra.mxu0 %v1638
  %1662 = vmatmul.bf16.gmra.mxu0 %v1589
  %v1663 = vpop.f32.mrf.mxu0
  %v1664 = vadd.f32 0.0, %v1663
  %v1665 = vpop.f32.mrf.mxu0
  %1666 = vdwg.mxu0
  %v1667 = vadd.f32 %v1587, %v1664
  %v1668 = vtanh.pop %v1667
  %v1669 = vpack.c.bf16 %v1668, %v1668
  %v1670 = vld [vmem:[%s2] sm:$0xf]
  %v1671 = vld [vmem:[%s2 + $0x4] sm:$0xf]
  %v1672 = vld [vmem:[%s2 + $0x8] sm:$0xf]
  %v1673 = vld [vmem:[%s2 + $0xc] sm:$0xf]
  %v1674 = vld [vmem:[%s2 + $0x10] sm:$0xf]
  %v1675 = vld [vmem:[%s2 + $0x14] sm:$0xf]
  %v1676 = vld [vmem:[%s2 + $0x18] sm:$0xf]
  %v1677 = vld [vmem:[%s2 + $0x1c] sm:$0xf]
  %v1678 = vld [vmem:[%s2 + $0x20] sm:$0xf]
  %v1679 = vld [vmem:[%s2 + $0x24] sm:$0xf]
  %v1680 = vld [vmem:[%s2 + $0x28] sm:$0xf]
  %v1681 = vld [vmem:[%s2 + $0x2c] sm:$0xf]
  %v1682 = vld [vmem:[%s2 + $0x30] sm:$0xf]
  %v1683 = vld [vmem:[%s2 + $0x34] sm:$0xf]
  %v1684 = vld [vmem:[%s2 + $0x38] sm:$0xf]
  %v1685 = vld [vmem:[%s2 + $0x3c] sm:$0xf]
  %v1702 = vunpack.c.l.b16 %v1670
  %v1703 = vunpack.c.l.b16 %v1671
  %v1704 = vunpack.c.l.b16 %v1672
  %v1705 = vunpack.c.l.b16 %v1673
  %v1706 = vunpack.c.l.b16 %v1674
  %v1707 = vunpack.c.l.b16 %v1675
  %v1708 = vunpack.c.l.b16 %v1676
  %v1709 = vunpack.c.l.b16 %v1677
  %v1710 = vunpack.c.l.b16 %v1678
  %v1711 = vunpack.c.l.b16 %v1679
  %v1712 = vunpack.c.l.b16 %v1680
  %v1713 = vunpack.c.l.b16 %v1681
  %v1714 = vunpack.c.l.b16 %v1682
  %v1715 = vunpack.c.l.b16 %v1683
  %v1716 = vunpack.c.l.b16 %v1684
  %v1717 = vunpack.c.l.b16 %v1685
  %v1718 = vpack.c.b16 %v1703, %v1702
  %v1719 = vpack.c.b16 %v1705, %v1704
  %v1720 = vpack.c.b16 %v1707, %v1706
  %v1721 = vpack.c.b16 %v1709, %v1708
  %v1722 = vpack.c.b16 %v1711, %v1710
  %v1723 = vpack.c.b16 %v1713, %v1712
  %v1724 = vpack.c.b16 %v1715, %v1714
  %v1725 = vpack.c.b16 %v1717, %v1716
  %1734 = vmatpush.bf16.msra.mxu0 %v1725
  %1735 = vmatpush.bf16.msra.mxu0 %v1724
  %1736 = vmatpush.bf16.msra.mxu0 %v1723
  %1737 = vmatpush.bf16.msra.mxu0 %v1722
  %1738 = vmatpush.bf16.msra.mxu0 %v1721
  %1739 = vmatpush.bf16.msra.mxu0 %v1720
  %1740 = vmatpush.bf16.msra.mxu0 %v1719
  %1741 = vmatpush.bf16.msra.mxu0 %v1718
  %1742 = vmatmul.bf16.gmra.mxu0 %v1669
  %v1743 = vpop.f32.mrf.mxu0
  %v1744 = vadd.f32 %v1582, %v1743
  %v1745 = vpop.f32.mrf.mxu0
  %1746 = vdwg.mxu0
  %v1747 = vadd.f32 %v1744, %v28
  %v1748 = vtanh.pop %v1747
  %1749 = vst [vmem:[#allocation2] sm:$0xff] %v1668
  %1750 = vst [vmem:[#allocation3] sm:$0xff] %v1748
  %v1751 = vld [vmem:[%s7] sm:$0xff]
  %v1752 = vpack.c.bf16 %v1748, %v1748
  %s1753 = scalar_lea.vmem %s5, 320
  %v1754 = vld [vmem:[%s1753] sm:$0xf]
  %v1755 = vld [vmem:[%s1753 + $0x4] sm:$0xf]
  %v1756 = vld [vmem:[%s1753 + $0x8] sm:$0xf]
  %v1757 = vld [vmem:[%s1753 + $0xc] sm:$0xf]
  %v1758 = vld [vmem:[%s1753 + $0x10] sm:$0xf]
  %v1759 = vld [vmem:[%s1753 + $0x14] sm:$0xf]
  %v1760 = vld [vmem:[%s1753 + $0x18] sm:$0xf]
  %v1761 = vld [vmem:[%s1753 + $0x1c] sm:$0xf]
  %v1762 = vld [vmem:[%s1753 + $0x20] sm:$0xf]
  %v1763 = vld [vmem:[%s1753 + $0x24] sm:$0xf]
  %v1764 = vld [vmem:[%s1753 + $0x28] sm:$0xf]
  %v1765 = vld [vmem:[%s1753 + $0x2c] sm:$0xf]
  %v1766 = vld [vmem:[%s1753 + $0x30] sm:$0xf]
  %v1767 = vld [vmem:[%s1753 + $0x34] sm:$0xf]
  %v1768 = vld [vmem:[%s1753 + $0x38] sm:$0xf]
  %v1769 = vld [vmem:[%s1753 + $0x3c] sm:$0xf]
  %v1786 = vunpack.c.l.b16 %v1754
  %v1787 = vunpack.c.l.b16 %v1755
  %v1788 = vunpack.c.l.b16 %v1756
  %v1789 = vunpack.c.l.b16 %v1757
  %v1790 = vunpack.c.l.b16 %v1758
  %v1791 = vunpack.c.l.b16 %v1759
  %v1792 = vunpack.c.l.b16 %v1760
  %v1793 = vunpack.c.l.b16 %v1761
  %v1794 = vunpack.c.l.b16 %v1762
  %v1795 = vunpack.c.l.b16 %v1763
  %v1796 = vunpack.c.l.b16 %v1764
  %v1797 = vunpack.c.l.b16 %v1765
  %v1798 = vunpack.c.l.b16 %v1766
  %v1799 = vunpack.c.l.b16 %v1767
  %v1800 = vunpack.c.l.b16 %v1768
  %v1801 = vunpack.c.l.b16 %v1769
  %v1802 = vpack.c.b16 %v1787, %v1786
  %v1803 = vpack.c.b16 %v1789, %v1788
  %v1804 = vpack.c.b16 %v1791, %v1790
  %v1805 = vpack.c.b16 %v1793, %v1792
  %v1806 = vpack.c.b16 %v1795, %v1794
  %v1807 = vpack.c.b16 %v1797, %v1796
  %v1808 = vpack.c.b16 %v1799, %v1798
  %v1809 = vpack.c.b16 %v1801, %v1800
  %1818 = vmatpush.bf16.msra.mxu0 %v1809
  %1819 = vmatpush.bf16.msra.mxu0 %v1808
  %1820 = vmatpush.bf16.msra.mxu0 %v1807
  %1821 = vmatpush.bf16.msra.mxu0 %v1806
  %1822 = vmatpush.bf16.msra.mxu0 %v1805
  %1823 = vmatpush.bf16.msra.mxu0 %v1804
  %1824 = vmatpush.bf16.msra.mxu0 %v1803
  %1825 = vmatpush.bf16.msra.mxu0 %v1802
  %1826 = vmatmul.bf16.gmra.mxu0 %v1752
  %v1827 = vpop.f32.mrf.mxu0
  %v1828 = vadd.f32 0.0, %v1827
  %v1829 = vpop.f32.mrf.mxu0
  %1830 = vdwg.mxu0
  %v1831 = vadd.f32 %v1751, %v1828
  %1832 = vst [vmem:[%s7] sm:$0xff] %v1831
  %v1833 = vld [vmem:[#allocation3] sm:$0xff]
  %v1834 = vpack.c.bf16 %v1833, %v1833
  %v1835 = vld [vmem:[%s3] sm:$0xf]
  %v1836 = vld [vmem:[%s3 + $0x4] sm:$0xf]
  %v1837 = vld [vmem:[%s3 + $0x8] sm:$0xf]
  %v1838 = vld [vmem:[%s3 + $0xc] sm:$0xf]
  %v1839 = vld [vmem:[%s3 + $0x10] sm:$0xf]
  %v1840 = vld [vmem:[%s3 + $0x14] sm:$0xf]
  %v1841 = vld [vmem:[%s3 + $0x18] sm:$0xf]
  %v1842 = vld [vmem:[%s3 + $0x1c] sm:$0xf]
  %v1843 = vld [vmem:[%s3 + $0x20] sm:$0xf]
  %v1844 = vld [vmem:[%s3 + $0x24] sm:$0xf]
  %v1845 = vld [vmem:[%s3 + $0x28] sm:$0xf]
  %v1846 = vld [vmem:[%s3 + $0x2c] sm:$0xf]
  %v1847 = vld [vmem:[%s3 + $0x30] sm:$0xf]
  %v1848 = vld [vmem:[%s3 + $0x34] sm:$0xf]
  %v1849 = vld [vmem:[%s3 + $0x38] sm:$0xf]
  %v1850 = vld [vmem:[%s3 + $0x3c] sm:$0xf]
  %v1867 = vunpack.c.l.b16 %v1835
  %v1868 = vunpack.c.l.b16 %v1836
  %v1869 = vunpack.c.l.b16 %v1837
  %v1870 = vunpack.c.l.b16 %v1838
  %v1871 = vunpack.c.l.b16 %v1839
  %v1872 = vunpack.c.l.b16 %v1840
  %v1873 = vunpack.c.l.b16 %v1841
  %v1874 = vunpack.c.l.b16 %v1842
  %v1875 = vunpack.c.l.b16 %v1843
  %v1876 = vunpack.c.l.b16 %v1844
  %v1877 = vunpack.c.l.b16 %v1845
  %v1878 = vunpack.c.l.b16 %v1846
  %v1879 = vunpack.c.l.b16 %v1847
  %v1880 = vunpack.c.l.b16 %v1848
  %v1881 = vunpack.c.l.b16 %v1849
  %v1882 = vunpack.c.l.b16 %v1850
  %v1883 = vpack.c.b16 %v1868, %v1867
  %v1884 = vpack.c.b16 %v1870, %v1869
  %v1885 = vpack.c.b16 %v1872, %v1871
  %v1886 = vpack.c.b16 %v1874, %v1873
  %v1887 = vpack.c.b16 %v1876, %v1875
  %v1888 = vpack.c.b16 %v1878, %v1877
  %v1889 = vpack.c.b16 %v1880, %v1879
  %v1890 = vpack.c.b16 %v1882, %v1881
  %1899 = vmatpush.bf16.msra.mxu0 %v1890
  %1900 = vmatpush.bf16.msra.mxu0 %v1889
  %1901 = vmatpush.bf16.msra.mxu0 %v1888
  %1902 = vmatpush.bf16.msra.mxu0 %v1887
  %1903 = vmatpush.bf16.msra.mxu0 %v1886
  %1904 = vmatpush.bf16.msra.mxu0 %v1885
  %1905 = vmatpush.bf16.msra.mxu0 %v1884
  %1906 = vmatpush.bf16.msra.mxu0 %v1883
  %1907 = vmatmul.bf16.gmra.mxu0 %v1834
  %v1908 = vpop.f32.mrf.mxu0
  %v1909 = vadd.f32 0.0, %v1908
  %v1910 = vpop.f32.mrf.mxu0
  %1911 = vdwg.mxu0
  %s1912 = scalar_lea.vmem %s0, 24
  %v1913 = vld [vmem:[%s1912] sm:$0xf]
  %v1914 = vunpack.c.l.bf16 %v1913
  %v1915 = vld [vmem:[#allocation2] sm:$0xff]
  %v1916 = vpack.c.bf16 %v1915, %v1915
  %v1917 = vld [vmem:[%s1] sm:$0xf]
  %v1918 = vld [vmem:[%s1 + $0x4] sm:$0xf]
  %v1919 = vld [vmem:[%s1 + $0x8] sm:$0xf]
  %v1920 = vld [vmem:[%s1 + $0xc] sm:$0xf]
  %v1921 = vld [vmem:[%s1 + $0x10] sm:$0xf]
  %v1922 = vld [vmem:[%s1 + $0x14] sm:$0xf]
  %v1923 = vld [vmem:[%s1 + $0x18] sm:$0xf]
  %v1924 = vld [vmem:[%s1 + $0x1c] sm:$0xf]
  %v1925 = vld [vmem:[%s1 + $0x20] sm:$0xf]
  %v1926 = vld [vmem:[%s1 + $0x24] sm:$0xf]
  %v1927 = vld [vmem:[%s1 + $0x28] sm:$0xf]
  %v1928 = vld [vmem:[%s1 + $0x2c] sm:$0xf]
  %v1929 = vld [vmem:[%s1 + $0x30] sm:$0xf]
  %v1930 = vld [vmem:[%s1 + $0x34] sm:$0xf]
  %v1931 = vld [vmem:[%s1 + $0x38] sm:$0xf]
  %v1932 = vld [vmem:[%s1 + $0x3c] sm:$0xf]
  %v1949 = vunpack.c.l.b16 %v1917
  %v1950 = vunpack.c.l.b16 %v1918
  %v1951 = vunpack.c.l.b16 %v1919
  %v1952 = vunpack.c.l.b16 %v1920
  %v1953 = vunpack.c.l.b16 %v1921
  %v1954 = vunpack.c.l.b16 %v1922
  %v1955 = vunpack.c.l.b16 %v1923
  %v1956 = vunpack.c.l.b16 %v1924
  %v1957 = vunpack.c.l.b16 %v1925
  %v1958 = vunpack.c.l.b16 %v1926
  %v1959 = vunpack.c.l.b16 %v1927
  %v1960 = vunpack.c.l.b16 %v1928
  %v1961 = vunpack.c.l.b16 %v1929
  %v1962 = vunpack.c.l.b16 %v1930
  %v1963 = vunpack.c.l.b16 %v1931
  %v1964 = vunpack.c.l.b16 %v1932
  %v1965 = vpack.c.b16 %v1950, %v1949
  %v1966 = vpack.c.b16 %v1952, %v1951
  %v1967 = vpack.c.b16 %v1954, %v1953
  %v1968 = vpack.c.b16 %v1956, %v1955
  %v1969 = vpack.c.b16 %v1958, %v1957
  %v1970 = vpack.c.b16 %v1960, %v1959
  %v1971 = vpack.c.b16 %v1962, %v1961
  %v1972 = vpack.c.b16 %v1964, %v1963
  %1981 = vmatpush.bf16.msra.mxu0 %v1972
  %1982 = vmatpush.bf16.msra.mxu0 %v1971
  %1983 = vmatpush.bf16.msra.mxu0 %v1970
  %1984 = vmatpush.bf16.msra.mxu0 %v1969
  %1985 = vmatpush.bf16.msra.mxu0 %v1968
  %1986 = vmatpush.bf16.msra.mxu0 %v1967
  %1987 = vmatpush.bf16.msra.mxu0 %v1966
  %1988 = vmatpush.bf16.msra.mxu0 %v1965
  %1989 = vmatmul.bf16.gmra.mxu0 %v1916
  %v1990 = vpop.f32.mrf.mxu0
  %v1991 = vadd.f32 0.0, %v1990
  %v1992 = vpop.f32.mrf.mxu0
  %1993 = vdwg.mxu0
  %v1994 = vadd.f32 %v1914, %v1991
  %v1995 = vtanh.pop %v1994
  %v1996 = vpack.c.bf16 %v1995, %v1995
  %v1997 = vld [vmem:[%s2] sm:$0xf]
  %v1998 = vld [vmem:[%s2 + $0x4] sm:$0xf]
  %v1999 = vld [vmem:[%s2 + $0x8] sm:$0xf]
  %v2000 = vld [vmem:[%s2 + $0xc] sm:$0xf]
  %v2001 = vld [vmem:[%s2 + $0x10] sm:$0xf]
  %v2002 = vld [vmem:[%s2 + $0x14] sm:$0xf]
  %v2003 = vld [vmem:[%s2 + $0x18] sm:$0xf]
  %v2004 = vld [vmem:[%s2 + $0x1c] sm:$0xf]
  %v2005 = vld [vmem:[%s2 + $0x20] sm:$0xf]
  %v2006 = vld [vmem:[%s2 + $0x24] sm:$0xf]
  %v2007 = vld [vmem:[%s2 + $0x28] sm:$0xf]
  %v2008 = vld [vmem:[%s2 + $0x2c] sm:$0xf]
  %v2009 = vld [vmem:[%s2 + $0x30] sm:$0xf]
  %v2010 = vld [vmem:[%s2 + $0x34] sm:$0xf]
  %v2011 = vld [vmem:[%s2 + $0x38] sm:$0xf]
  %v2012 = vld [vmem:[%s2 + $0x3c] sm:$0xf]
  %v2029 = vunpack.c.l.b16 %v1997
  %v2030 = vunpack.c.l.b16 %v1998
  %v2031 = vunpack.c.l.b16 %v1999
  %v2032 = vunpack.c.l.b16 %v2000
  %v2033 = vunpack.c.l.b16 %v2001
  %v2034 = vunpack.c.l.b16 %v2002
  %v2035 = vunpack.c.l.b16 %v2003
  %v2036 = vunpack.c.l.b16 %v2004
  %v2037 = vunpack.c.l.b16 %v2005
  %v2038 = vunpack.c.l.b16 %v2006
  %v2039 = vunpack.c.l.b16 %v2007
  %v2040 = vunpack.c.l.b16 %v2008
  %v2041 = vunpack.c.l.b16 %v2009
  %v2042 = vunpack.c.l.b16 %v2010
  %v2043 = vunpack.c.l.b16 %v2011
  %v2044 = vunpack.c.l.b16 %v2012
  %v2045 = vpack.c.b16 %v2030, %v2029
  %v2046 = vpack.c.b16 %v2032, %v2031
  %v2047 = vpack.c.b16 %v2034, %v2033
  %v2048 = vpack.c.b16 %v2036, %v2035
  %v2049 = vpack.c.b16 %v2038, %v2037
  %v2050 = vpack.c.b16 %v2040, %v2039
  %v2051 = vpack.c.b16 %v2042, %v2041
  %v2052 = vpack.c.b16 %v2044, %v2043
  %2061 = vmatpush.bf16.msra.mxu0 %v2052
  %2062 = vmatpush.bf16.msra.mxu0 %v2051
  %2063 = vmatpush.bf16.msra.mxu0 %v2050
  %2064 = vmatpush.bf16.msra.mxu0 %v2049
  %2065 = vmatpush.bf16.msra.mxu0 %v2048
  %2066 = vmatpush.bf16.msra.mxu0 %v2047
  %2067 = vmatpush.bf16.msra.mxu0 %v2046
  %2068 = vmatpush.bf16.msra.mxu0 %v2045
  %2069 = vmatmul.bf16.gmra.mxu0 %v1996
  %v2070 = vpop.f32.mrf.mxu0
  %v2071 = vadd.f32 %v1909, %v2070
  %v2072 = vpop.f32.mrf.mxu0
  %2073 = vdwg.mxu0
  %v2074 = vadd.f32 %v2071, %v28
  %v2075 = vtanh.pop %v2074
  %2076 = vst [vmem:[#allocation2] sm:$0xff] %v1995
  %2077 = vst [vmem:[#allocation3] sm:$0xff] %v2075
  %v2078 = vld [vmem:[%s7] sm:$0xff]
  %v2079 = vpack.c.bf16 %v2075, %v2075
  %s2080 = scalar_lea.vmem %s5, 384
  %v2081 = vld [vmem:[%s2080] sm:$0xf]
  %v2082 = vld [vmem:[%s2080 + $0x4] sm:$0xf]
  %v2083 = vld [vmem:[%s2080 + $0x8] sm:$0xf]
  %v2084 = vld [vmem:[%s2080 + $0xc] sm:$0xf]
  %v2085 = vld [vmem:[%s2080 + $0x10] sm:$0xf]
  %v2086 = vld [vmem:[%s2080 + $0x14] sm:$0xf]
  %v2087 = vld [vmem:[%s2080 + $0x18] sm:$0xf]
  %v2088 = vld [vmem:[%s2080 + $0x1c] sm:$0xf]
  %v2089 = vld [vmem:[%s2080 + $0x20] sm:$0xf]
  %v2090 = vld [vmem:[%s2080 + $0x24] sm:$0xf]
  %v2091 = vld [vmem:[%s2080 + $0x28] sm:$0xf]
  %v2092 = vld [vmem:[%s2080 + $0x2c] sm:$0xf]
  %v2093 = vld [vmem:[%s2080 + $0x30] sm:$0xf]
  %v2094 = vld [vmem:[%s2080 + $0x34] sm:$0xf]
  %v2095 = vld [vmem:[%s2080 + $0x38] sm:$0xf]
  %v2096 = vld [vmem:[%s2080 + $0x3c] sm:$0xf]
  %v2113 = vunpack.c.l.b16 %v2081
  %v2114 = vunpack.c.l.b16 %v2082
  %v2115 = vunpack.c.l.b16 %v2083
  %v2116 = vunpack.c.l.b16 %v2084
  %v2117 = vunpack.c.l.b16 %v2085
  %v2118 = vunpack.c.l.b16 %v2086
  %v2119 = vunpack.c.l.b16 %v2087
  %v2120 = vunpack.c.l.b16 %v2088
  %v2121 = vunpack.c.l.b16 %v2089
  %v2122 = vunpack.c.l.b16 %v2090
  %v2123 = vunpack.c.l.b16 %v2091
  %v2124 = vunpack.c.l.b16 %v2092
  %v2125 = vunpack.c.l.b16 %v2093
  %v2126 = vunpack.c.l.b16 %v2094
  %v2127 = vunpack.c.l.b16 %v2095
  %v2128 = vunpack.c.l.b16 %v2096
  %v2129 = vpack.c.b16 %v2114, %v2113
  %v2130 = vpack.c.b16 %v2116, %v2115
  %v2131 = vpack.c.b16 %v2118, %v2117
  %v2132 = vpack.c.b16 %v2120, %v2119
  %v2133 = vpack.c.b16 %v2122, %v2121
  %v2134 = vpack.c.b16 %v2124, %v2123
  %v2135 = vpack.c.b16 %v2126, %v2125
  %v2136 = vpack.c.b16 %v2128, %v2127
  %2145 = vmatpush.bf16.msra.mxu0 %v2136
  %2146 = vmatpush.bf16.msra.mxu0 %v2135
  %2147 = vmatpush.bf16.msra.mxu0 %v2134
  %2148 = vmatpush.bf16.msra.mxu0 %v2133
  %2149 = vmatpush.bf16.msra.mxu0 %v2132
  %2150 = vmatpush.bf16.msra.mxu0 %v2131
  %2151 = vmatpush.bf16.msra.mxu0 %v2130
  %2152 = vmatpush.bf16.msra.mxu0 %v2129
  %2153 = vmatmul.bf16.gmra.mxu0 %v2079
  %v2154 = vpop.f32.mrf.mxu0
  %v2155 = vadd.f32 0.0, %v2154
  %v2156 = vpop.f32.mrf.mxu0
  %2157 = vdwg.mxu0
  %v2158 = vadd.f32 %v2078, %v2155
  %2159 = vst [vmem:[%s7] sm:$0xff] %v2158
  %v2160 = vld [vmem:[#allocation3] sm:$0xff]
  %v2161 = vpack.c.bf16 %v2160, %v2160
  %v2162 = vld [vmem:[%s3] sm:$0xf]
  %v2163 = vld [vmem:[%s3 + $0x4] sm:$0xf]
  %v2164 = vld [vmem:[%s3 + $0x8] sm:$0xf]
  %v2165 = vld [vmem:[%s3 + $0xc] sm:$0xf]
  %v2166 = vld [vmem:[%s3 + $0x10] sm:$0xf]
  %v2167 = vld [vmem:[%s3 + $0x14] sm:$0xf]
  %v2168 = vld [vmem:[%s3 + $0x18] sm:$0xf]
  %v2169 = vld [vmem:[%s3 + $0x1c] sm:$0xf]
  %v2170 = vld [vmem:[%s3 + $0x20] sm:$0xf]
  %v2171 = vld [vmem:[%s3 + $0x24] sm:$0xf]
  %v2172 = vld [vmem:[%s3 + $0x28] sm:$0xf]
  %v2173 = vld [vmem:[%s3 + $0x2c] sm:$0xf]
  %v2174 = vld [vmem:[%s3 + $0x30] sm:$0xf]
  %v2175 = vld [vmem:[%s3 + $0x34] sm:$0xf]
  %v2176 = vld [vmem:[%s3 + $0x38] sm:$0xf]
  %v2177 = vld [vmem:[%s3 + $0x3c] sm:$0xf]
  %v2194 = vunpack.c.l.b16 %v2162
  %v2195 = vunpack.c.l.b16 %v2163
  %v2196 = vunpack.c.l.b16 %v2164
  %v2197 = vunpack.c.l.b16 %v2165
  %v2198 = vunpack.c.l.b16 %v2166
  %v2199 = vunpack.c.l.b16 %v2167
  %v2200 = vunpack.c.l.b16 %v2168
  %v2201 = vunpack.c.l.b16 %v2169
  %v2202 = vunpack.c.l.b16 %v2170
  %v2203 = vunpack.c.l.b16 %v2171
  %v2204 = vunpack.c.l.b16 %v2172
  %v2205 = vunpack.c.l.b16 %v2173
  %v2206 = vunpack.c.l.b16 %v2174
  %v2207 = vunpack.c.l.b16 %v2175
  %v2208 = vunpack.c.l.b16 %v2176
  %v2209 = vunpack.c.l.b16 %v2177
  %v2210 = vpack.c.b16 %v2195, %v2194
  %v2211 = vpack.c.b16 %v2197, %v2196
  %v2212 = vpack.c.b16 %v2199, %v2198
  %v2213 = vpack.c.b16 %v2201, %v2200
  %v2214 = vpack.c.b16 %v2203, %v2202
  %v2215 = vpack.c.b16 %v2205, %v2204
  %v2216 = vpack.c.b16 %v2207, %v2206
  %v2217 = vpack.c.b16 %v2209, %v2208
  %2226 = vmatpush.bf16.msra.mxu0 %v2217
  %2227 = vmatpush.bf16.msra.mxu0 %v2216
  %2228 = vmatpush.bf16.msra.mxu0 %v2215
  %2229 = vmatpush.bf16.msra.mxu0 %v2214
  %2230 = vmatpush.bf16.msra.mxu0 %v2213
  %2231 = vmatpush.bf16.msra.mxu0 %v2212
  %2232 = vmatpush.bf16.msra.mxu0 %v2211
  %2233 = vmatpush.bf16.msra.mxu0 %v2210
  %2234 = vmatmul.bf16.gmra.mxu0 %v2161
  %v2235 = vpop.f32.mrf.mxu0
  %v2236 = vadd.f32 0.0, %v2235
  %v2237 = vpop.f32.mrf.mxu0
  %2238 = vdwg.mxu0
  %s2239 = scalar_lea.vmem %s0, 28
  %v2240 = vld [vmem:[%s2239] sm:$0xf]
  %v2241 = vunpack.c.l.bf16 %v2240
  %v2242 = vld [vmem:[#allocation2] sm:$0xff]
  %v2243 = vpack.c.bf16 %v2242, %v2242
  %v2244 = vld [vmem:[%s1] sm:$0xf]
  %v2245 = vld [vmem:[%s1 + $0x4] sm:$0xf]
  %v2246 = vld [vmem:[%s1 + $0x8] sm:$0xf]
  %v2247 = vld [vmem:[%s1 + $0xc] sm:$0xf]
  %v2248 = vld [vmem:[%s1 + $0x10] sm:$0xf]
  %v2249 = vld [vmem:[%s1 + $0x14] sm:$0xf]
  %v2250 = vld [vmem:[%s1 + $0x18] sm:$0xf]
  %v2251 = vld [vmem:[%s1 + $0x1c] sm:$0xf]
  %v2252 = vld [vmem:[%s1 + $0x20] sm:$0xf]
  %v2253 = vld [vmem:[%s1 + $0x24] sm:$0xf]
  %v2254 = vld [vmem:[%s1 + $0x28] sm:$0xf]
  %v2255 = vld [vmem:[%s1 + $0x2c] sm:$0xf]
  %v2256 = vld [vmem:[%s1 + $0x30] sm:$0xf]
  %v2257 = vld [vmem:[%s1 + $0x34] sm:$0xf]
  %v2258 = vld [vmem:[%s1 + $0x38] sm:$0xf]
  %v2259 = vld [vmem:[%s1 + $0x3c] sm:$0xf]
  %v2276 = vunpack.c.l.b16 %v2244
  %v2277 = vunpack.c.l.b16 %v2245
  %v2278 = vunpack.c.l.b16 %v2246
  %v2279 = vunpack.c.l.b16 %v2247
  %v2280 = vunpack.c.l.b16 %v2248
  %v2281 = vunpack.c.l.b16 %v2249
  %v2282 = vunpack.c.l.b16 %v2250
  %v2283 = vunpack.c.l.b16 %v2251
  %v2284 = vunpack.c.l.b16 %v2252
  %v2285 = vunpack.c.l.b16 %v2253
  %v2286 = vunpack.c.l.b16 %v2254
  %v2287 = vunpack.c.l.b16 %v2255
  %v2288 = vunpack.c.l.b16 %v2256
  %v2289 = vunpack.c.l.b16 %v2257
  %v2290 = vunpack.c.l.b16 %v2258
  %v2291 = vunpack.c.l.b16 %v2259
  %v2292 = vpack.c.b16 %v2277, %v2276
  %v2293 = vpack.c.b16 %v2279, %v2278
  %v2294 = vpack.c.b16 %v2281, %v2280
  %v2295 = vpack.c.b16 %v2283, %v2282
  %v2296 = vpack.c.b16 %v2285, %v2284
  %v2297 = vpack.c.b16 %v2287, %v2286
  %v2298 = vpack.c.b16 %v2289, %v2288
  %v2299 = vpack.c.b16 %v2291, %v2290
  %2308 = vmatpush.bf16.msra.mxu0 %v2299
  %2309 = vmatpush.bf16.msra.mxu0 %v2298
  %2310 = vmatpush.bf16.msra.mxu0 %v2297
  %2311 = vmatpush.bf16.msra.mxu0 %v2296
  %2312 = vmatpush.bf16.msra.mxu0 %v2295
  %2313 = vmatpush.bf16.msra.mxu0 %v2294
  %2314 = vmatpush.bf16.msra.mxu0 %v2293
  %2315 = vmatpush.bf16.msra.mxu0 %v2292
  %2316 = vmatmul.bf16.gmra.mxu0 %v2243
  %v2317 = vpop.f32.mrf.mxu0
  %v2318 = vadd.f32 0.0, %v2317
  %v2319 = vpop.f32.mrf.mxu0
  %2320 = vdwg.mxu0
  %v2321 = vadd.f32 %v2241, %v2318
  %v2322 = vtanh.pop %v2321
  %v2323 = vpack.c.bf16 %v2322, %v2322
  %v2324 = vld [vmem:[%s2] sm:$0xf]
  %v2325 = vld [vmem:[%s2 + $0x4] sm:$0xf]
  %v2326 = vld [vmem:[%s2 + $0x8] sm:$0xf]
  %v2327 = vld [vmem:[%s2 + $0xc] sm:$0xf]
  %v2328 = vld [vmem:[%s2 + $0x10] sm:$0xf]
  %v2329 = vld [vmem:[%s2 + $0x14] sm:$0xf]
  %v2330 = vld [vmem:[%s2 + $0x18] sm:$0xf]
  %v2331 = vld [vmem:[%s2 + $0x1c] sm:$0xf]
  %v2332 = vld [vmem:[%s2 + $0x20] sm:$0xf]
  %v2333 = vld [vmem:[%s2 + $0x24] sm:$0xf]
  %v2334 = vld [vmem:[%s2 + $0x28] sm:$0xf]
  %v2335 = vld [vmem:[%s2 + $0x2c] sm:$0xf]
  %v2336 = vld [vmem:[%s2 + $0x30] sm:$0xf]
  %v2337 = vld [vmem:[%s2 + $0x34] sm:$0xf]
  %v2338 = vld [vmem:[%s2 + $0x38] sm:$0xf]
  %v2339 = vld [vmem:[%s2 + $0x3c] sm:$0xf]
  %v2356 = vunpack.c.l.b16 %v2324
  %v2357 = vunpack.c.l.b16 %v2325
  %v2358 = vunpack.c.l.b16 %v2326
  %v2359 = vunpack.c.l.b16 %v2327
  %v2360 = vunpack.c.l.b16 %v2328
  %v2361 = vunpack.c.l.b16 %v2329
  %v2362 = vunpack.c.l.b16 %v2330
  %v2363 = vunpack.c.l.b16 %v2331
  %v2364 = vunpack.c.l.b16 %v2332
  %v2365 = vunpack.c.l.b16 %v2333
  %v2366 = vunpack.c.l.b16 %v2334
  %v2367 = vunpack.c.l.b16 %v2335
  %v2368 = vunpack.c.l.b16 %v2336
  %v2369 = vunpack.c.l.b16 %v2337
  %v2370 = vunpack.c.l.b16 %v2338
  %v2371 = vunpack.c.l.b16 %v2339
  %v2372 = vpack.c.b16 %v2357, %v2356
  %v2373 = vpack.c.b16 %v2359, %v2358
  %v2374 = vpack.c.b16 %v2361, %v2360
  %v2375 = vpack.c.b16 %v2363, %v2362
  %v2376 = vpack.c.b16 %v2365, %v2364
  %v2377 = vpack.c.b16 %v2367, %v2366
  %v2378 = vpack.c.b16 %v2369, %v2368
  %v2379 = vpack.c.b16 %v2371, %v2370
  %2388 = vmatpush.bf16.msra.mxu0 %v2379
  %2389 = vmatpush.bf16.msra.mxu0 %v2378
  %2390 = vmatpush.bf16.msra.mxu0 %v2377
  %2391 = vmatpush.bf16.msra.mxu0 %v2376
  %2392 = vmatpush.bf16.msra.mxu0 %v2375
  %2393 = vmatpush.bf16.msra.mxu0 %v2374
  %2394 = vmatpush.bf16.msra.mxu0 %v2373
  %2395 = vmatpush.bf16.msra.mxu0 %v2372
  %2396 = vmatmul.bf16.gmra.mxu0 %v2323
  %v2397 = vpop.f32.mrf.mxu0
  %v2398 = vadd.f32 %v2236, %v2397
  %v2399 = vpop.f32.mrf.mxu0
  %2400 = vdwg.mxu0
  %v2401 = vadd.f32 %v2398, %v28
  %v2402 = vtanh.pop %v2401
  %2403 = vst [vmem:[#allocation2] sm:$0xff] %v2322
  %2404 = vst [vmem:[#allocation3] sm:$0xff] %v2402
  %v2405 = vld [vmem:[%s7] sm:$0xff]
  %v2406 = vpack.c.bf16 %v2402, %v2402
  %s2407 = scalar_lea.vmem %s5, 448
  %v2408 = vld [vmem:[%s2407] sm:$0xf]
  %v2409 = vld [vmem:[%s2407 + $0x4] sm:$0xf]
  %v2410 = vld [vmem:[%s2407 + $0x8] sm:$0xf]
  %v2411 = vld [vmem:[%s2407 + $0xc] sm:$0xf]
  %v2412 = vld [vmem:[%s2407 + $0x10] sm:$0xf]
  %v2413 = vld [vmem:[%s2407 + $0x14] sm:$0xf]
  %v2414 = vld [vmem:[%s2407 + $0x18] sm:$0xf]
  %v2415 = vld [vmem:[%s2407 + $0x1c] sm:$0xf]
  %v2416 = vld [vmem:[%s2407 + $0x20] sm:$0xf]
  %v2417 = vld [vmem:[%s2407 + $0x24] sm:$0xf]
  %v2418 = vld [vmem:[%s2407 + $0x28] sm:$0xf]
  %v2419 = vld [vmem:[%s2407 + $0x2c] sm:$0xf]
  %v2420 = vld [vmem:[%s2407 + $0x30] sm:$0xf]
  %v2421 = vld [vmem:[%s2407 + $0x34] sm:$0xf]
  %v2422 = vld [vmem:[%s2407 + $0x38] sm:$0xf]
  %v2423 = vld [vmem:[%s2407 + $0x3c] sm:$0xf]
  %v2440 = vunpack.c.l.b16 %v2408
  %v2441 = vunpack.c.l.b16 %v2409
  %v2442 = vunpack.c.l.b16 %v2410
  %v2443 = vunpack.c.l.b16 %v2411
  %v2444 = vunpack.c.l.b16 %v2412
  %v2445 = vunpack.c.l.b16 %v2413
  %v2446 = vunpack.c.l.b16 %v2414
  %v2447 = vunpack.c.l.b16 %v2415
  %v2448 = vunpack.c.l.b16 %v2416
  %v2449 = vunpack.c.l.b16 %v2417
  %v2450 = vunpack.c.l.b16 %v2418
  %v2451 = vunpack.c.l.b16 %v2419
  %v2452 = vunpack.c.l.b16 %v2420
  %v2453 = vunpack.c.l.b16 %v2421
  %v2454 = vunpack.c.l.b16 %v2422
  %v2455 = vunpack.c.l.b16 %v2423
  %v2456 = vpack.c.b16 %v2441, %v2440
  %v2457 = vpack.c.b16 %v2443, %v2442
  %v2458 = vpack.c.b16 %v2445, %v2444
  %v2459 = vpack.c.b16 %v2447, %v2446
  %v2460 = vpack.c.b16 %v2449, %v2448
  %v2461 = vpack.c.b16 %v2451, %v2450
  %v2462 = vpack.c.b16 %v2453, %v2452
  %v2463 = vpack.c.b16 %v2455, %v2454
  %2472 = vmatpush.bf16.msra.mxu0 %v2463
  %2473 = vmatpush.bf16.msra.mxu0 %v2462
  %2474 = vmatpush.bf16.msra.mxu0 %v2461
  %2475 = vmatpush.bf16.msra.mxu0 %v2460
  %2476 = vmatpush.bf16.msra.mxu0 %v2459
  %2477 = vmatpush.bf16.msra.mxu0 %v2458
  %2478 = vmatpush.bf16.msra.mxu0 %v2457
  %2479 = vmatpush.bf16.msra.mxu0 %v2456
  %2480 = vmatmul.bf16.gmra.mxu0 %v2406
  %v2481 = vpop.f32.mrf.mxu0
  %v2482 = vadd.f32 0.0, %v2481
  %v2483 = vpop.f32.mrf.mxu0
  %2484 = vdwg.mxu0
  %v2485 = vadd.f32 %v2405, %v2482
  %2486 = vst [vmem:[%s7] sm:$0xff] %v2485
  // Predicated region
  $region30: #{rnn_forward.1} parent=0 // pred_check
    _
  $region31: #{rnn_forward.1} parent=0 // pred_check_branch
    %2488 = sbr.rel (0) target = $region33
  $region32: #{rnn_forward.1} parent=0 // pred_region
    _
  $region33: #{rnn_forward.1} parent=0 // pred_fallthru
    _
  // Predicated region
  $region34: #{rnn_forward.1} parent=0 // pred_check
    _
  $region35: #{rnn_forward.1} parent=0 // pred_check_branch
    %2490 = sbr.rel (0) target = $region37
  $region36: #{rnn_forward.1} parent=0 // pred_region
    _
  $region37: #{rnn_forward.1} parent=0 // pred_fallthru
    _

</llo_original>
